<compile_context>
chip_gen: v7x
topology: tpu7x:2x2x1
jax: 0.10.0
libtpu: 0.0.40
codegen_flags: <defaults>
</compile_context>

<pallas_src>
import math
from functools import partial

import numpy as np
import jax
import jax.numpy as jnp
from jax.experimental import pallas as pl
from jax.experimental.pallas import tpu as pltpu


# ----------------------------------------------------------------------------
# Adaptive-average-pool weight matrices (exact PyTorch adaptive_avg_pool2d
# window semantics: start = floor(o*in/out), end = ceil((o+1)*in/out)).
# ----------------------------------------------------------------------------
def _adaptive_pool_matrix(in_size, out_size):
    m = np.zeros((out_size, in_size), np.float32)
    for o in range(out_size):
        s = (o * in_size) // out_size
        e = ((o + 1) * in_size + out_size - 1) // out_size  # ceil
        m[o, s:e] = 1.0 / (e - s)
    return m


# ----------------------------------------------------------------------------
# Generation-aware tile / VMEM budgets
# ----------------------------------------------------------------------------
def _vmem_budgets():
    try:
        cap = pltpu.get_tpu_info().vmem_capacity_bytes
    except Exception:
        cap = 128 * 1024 * 1024
    if cap <= 96 * 1024 * 1024:
        # v7x-class: 64 MiB VMEM per TensorCore -> smaller tiles, lower limit.
        return 3 * 1024 * 1024, 48 * 1024 * 1024
    # v5e / v6e: 128 MiB physical VMEM -> big tiles amortize per-step overhead.
    return 5 * 1024 * 1024, 64 * 1024 * 1024


def _choose_tiles(B, C, HW, itemsize, tile_budget):
    """Pick (channel_tile, spatial_tile) obeying the (8,128) block rules."""
    # Spatial tile: full plane, or a divisor of H*W that is a multiple of 128.
    s_cands = sorted({HW, *[d for d in range(128, HW, 128) if HW % d == 0]},
                     reverse=True)
    # Channel tile: full C, or a divisor of C that is a multiple of 8.
    c_cands = sorted({C, *[d for d in range(8, C, 8) if C % d == 0]},
                     reverse=True)

    def fits(tc, ts):
        return tc * ts * itemsize <= tile_budget

    for ts in s_cands:
        ok = [tc for tc in c_cands if fits(tc, ts)]
        if ok:
            tc = ok[0]
            # Keep >= 2 points on the parallel axes so both v7x TCs get work.
            if B * (C // tc) < 2:
                smaller = [t for t in ok if C // t >= 2]
                if smaller:
                    tc = smaller[0]
            return tc, ts
    # TODO(synk): pad H*W to a multiple of 128 so planes with no 128-multiple
    # divisor can still be spatially tiled instead of taken whole.
    return c_cands[-1], HW


# ----------------------------------------------------------------------------
# Pallas kernels
# ----------------------------------------------------------------------------
def _pool_kernel(x_ref, p_ref, o_ref):
    """pooled[c, p] += x[c, hw_chunk] @ P[p, hw_chunk]^T   (accumulate over s)."""
    s = pl.program_id(2)

    @pl.when(s == 0)
    def _():
        o_ref[0] = jnp.zeros((o_ref.shape[1], o_ref.shape[2]), o_ref.dtype)

    x = x_ref[0].astype(jnp.float32)                       # (tc, ts)
    part = jax.lax.dot_general(                            # (tc, NP) one MXU matmul
        x, p_ref[...], (((1,), (1,)), ((), ())),
        preferred_element_type=jnp.float32)
    o_ref[0] = o_ref[0] + part


def _apply_kernel(x_ref, att_ref, u_ref, o_ref):
    """out = x * (att5 @ Ukron)  on one (tc, ts) lane-dense chunk."""
    x = x_ref[0].astype(jnp.float32)                       # (tc, ts)
    up = jax.lax.dot_general(                              # (tc, ts) one MXU matmul
        att_ref[0], u_ref[...], (((1,), (0,)), ((), ())),
        preferred_element_type=jnp.float32)
    o_ref[0] = (x * up).astype(o_ref.dtype)


def _conv1d_kernel(w_ref, x_ref, o_ref):
    """'same' 1-D cross-correlation (nn.Conv1d(1,1,k,bias=False)); x pre-padded."""
    k = w_ref.shape[0]
    L = o_ref.shape[1]
    acc = w_ref[0] * x_ref[:, 0:L]
    for j in range(1, k):                # k is tiny (typically 3); static unroll
        acc = acc + w_ref[j] * x_ref[:, j:j + L]
    o_ref[...] = acc


# ----------------------------------------------------------------------------
# Pallas wrappers
# ----------------------------------------------------------------------------
def _pooled_stats(x3, p_aug, *, tc, ts, vmem_limit):
    """x3: (B, C, HW) native dtype -> (B, C, 26) f32 (25 local pools + exact global)."""
    B, C, HW = x3.shape
    NP = p_aug.shape[0]
    grid = (B, C // tc, HW // ts)
    return pl.pallas_call(
        _pool_kernel,
        out_shape=jax.ShapeDtypeStruct((B, C, NP), jnp.float32),
        grid=grid,
        in_specs=[pl.BlockSpec((1, tc, ts), lambda b, c, s: (b, c, s)),
                  pl.BlockSpec((NP, ts), lambda b, c, s: (0, s))],
        out_specs=pl.BlockSpec((1, tc, NP), lambda b, c, s: (b, c, 0)),
        compiler_params=pltpu.CompilerParams(
            dimension_semantics=("parallel", "parallel", "arbitrary"),
            vmem_limit_bytes=vmem_limit),
    )(x3, p_aug)


def _attention_apply(x3, att5, u_kron, *, tc, ts, vmem_limit):
    """out = x * upsample(att5); upsample fused as a single matmul per chunk."""
    B, C, HW = x3.shape
    NA = att5.shape[-1]
    grid = (B, C // tc, HW // ts)
    return pl.pallas_call(
        _apply_kernel,
        out_shape=jax.ShapeDtypeStruct((B, C, HW), x3.dtype),
        grid=grid,
        in_specs=[pl.BlockSpec((1, tc, ts), lambda b, c, s: (b, c, s)),
                  pl.BlockSpec((1, tc, NA), lambda b, c, s: (b, c, 0)),
                  pl.BlockSpec((NA, ts), lambda b, c, s: (0, s))],
        out_specs=pl.BlockSpec((1, tc, ts), lambda b, c, s: (b, c, s)),
        compiler_params=pltpu.CompilerParams(
            dimension_semantics=("parallel", "parallel", "parallel"),
            vmem_limit_bytes=vmem_limit),
    )(x3, att5, u_kron)


def conv1d_same(x, w):
    """'same' 1-D conv along last axis of (B, L); taps w (k,) live in SMEM."""
    B, L = x.shape
    k = int(w.shape[0])
    p = (k - 1) // 2
    xp = jnp.pad(x, ((0, 0), (p, p)))     # tiny tensor; fuses under jit
    return pl.pallas_call(
        _conv1d_kernel,
        out_shape=jax.ShapeDtypeStruct((B, L), x.dtype),
        in_specs=[pl.BlockSpec(memory_space=pltpu.MemorySpace.SMEM),
                  pl.BlockSpec(memory_space=pltpu.MemorySpace.VMEM)],
        out_specs=pl.BlockSpec(memory_space=pltpu.MemorySpace.VMEM),
    )(w, xp)


# ----------------------------------------------------------------------------
# MLCA forward (jitted; local_size / local_weight are static)
# ----------------------------------------------------------------------------
@partial(jax.jit, static_argnames=("local_size", "local_weight"))
def mlca_forward(x, conv_w, conv_local_w, local_size=5, local_weight=0.5):
    B, C, H, W = x.shape
    ls = int(local_size)
    lw = float(local_weight)
    HW = H * W
    npool = ls * ls

    # Pooling / upsample matrices composed into Kronecker form (host constants).
    ah = _adaptive_pool_matrix(H, ls)                     # (ls, H)
    aw = _adaptive_pool_matrix(W, ls)                     # (ls, W)
    p_kron = np.kron(ah, aw)                              # (25, HW)
    g_row = p_kron.sum(axis=0, keepdims=True) / npool     # exact mean of the 25 locals
    p_aug = jnp.asarray(np.concatenate([p_kron, g_row], axis=0))  # (26, HW)

    uh = _adaptive_pool_matrix(ls, H)                     # (H, ls)
    uw = _adaptive_pool_matrix(ls, W)                     # (W, ls)
    u_kron = jnp.asarray(np.kron(uh.T, uw.T))             # (25, HW)

    tile_budget, vmem_limit = _vmem_budgets()
    tc, ts = _choose_tiles(B, C, HW, x.dtype.itemsize, tile_budget)

    x3 = x.reshape(B, C, HW)                               # free view of contiguous NCHW

    # Pass 1: local 5x5 pool + exact global pool in one MXU matmul per tile.
    pooled = _pooled_stats(x3, p_aug, tc=tc, ts=ts, vmem_limit=vmem_limit)
    local = pooled[:, :, :npool]                           # (B, C, 25) f32
    glob = pooled[:, :, npool]                             # (B, C)     f32

    # Tiny O(B*C*25) glue: spatial-major/channel-minor sequence, convs, blend.
    seq_local = jnp.transpose(local, (0, 2, 1)).reshape(B, npool * C)
    y_local = conv1d_same(seq_local, conv_local_w)         # Pallas
    y_global = conv1d_same(glob, conv_w)                   # Pallas
    att_local = jax.nn.sigmoid(y_local).reshape(B, npool, C).transpose(0, 2, 1)
    att_global = jax.nn.sigmoid(y_global)[:, :, None]      # 1x1 -> 5x5 pool == broadcast
    att5 = att_global * (1.0 - lw) + att_local * lw         # (B, C, 25) f32

    # Pass 2: fused adaptive upsample + elementwise apply, output in x.dtype.
    out3 = _attention_apply(x3, att5, u_kron, tc=tc, ts=ts, vmem_limit=vmem_limit)
    return out3.reshape(B, C, H, W)


# ----------------------------------------------------------------------------
# Parameter init (matches the PyTorch constructor hyper-params)
# ----------------------------------------------------------------------------
def init_conv_weights(key, in_size, gamma=2, b=1):
    t = int(abs(math.log(in_size, 2) + b) / gamma)
    k = t if t % 2 else t + 1
    k1, k2 = jax.random.split(key)
    conv_w = 0.5 * jax.random.normal(k1, (k,), jnp.float32)
    conv_local_w = 0.5 * jax.random.normal(k2, (k,), jnp.float32)
    return conv_w, conv_local_w, k


# ----------------------------------------------------------------------------
# Pure-JAX reference (same math, plain XLA) for the in-script check
# ----------------------------------------------------------------------------
def _conv1d_ref(seq, w):
    k = int(w.shape[0])
    p = (k - 1) // 2
    xp = jnp.pad(seq, ((0, 0), (p, p)))
    return sum(w[j] * xp[:, j:j + seq.shape[1]] for j in range(k))


def mlca_reference(x, conv_w, conv_local_w, local_size, local_weight):
    B, C, H, W = x.shape
    ls = int(local_size)
    xf = x.astype(jnp.float32)
    ah = jnp.asarray(_adaptive_pool_matrix(H, ls))
    aw = jnp.asarray(_adaptive_pool_matrix(W, ls))
    uh = jnp.asarray(_adaptive_pool_matrix(ls, H))
    uw = jnp.asarray(_adaptive_pool_matrix(ls, W))

    local = jnp.einsum('lh,bchw,mw->bclm', ah, xf, aw)
    glob = jnp.mean(local, axis=(2, 3))                    # PyTorch: pool of local_arv
    seq_local = local.transpose(0, 2, 3, 1).reshape(B, ls * ls * C)
    y_local = _conv1d_ref(seq_local, conv_local_w)
    y_global = _conv1d_ref(glob, conv_w)
    att_local = jax.nn.sigmoid(y_local).reshape(B, ls * ls, C)
    att_local = att_local.transpose(0, 2, 1).reshape(B, C, ls, ls)
    att_global = jax.nn.sigmoid(y_global)[:, :, None, None]
    att5 = att_global * (1.0 - local_weight) + att_local * local_weight
    att_all = jnp.einsum('hl,bclm,wm->bchw', uh, att5, uw)
    return xf * att_all


# ----------------------------------------------------------------------------
if __name__ == "__main__":
    # Full-f32 matmuls on both the kernel and the reference path so the
    # self-check can be tight.
    jax.config.update("jax_default_matmul_precision", "float32")

    key = jax.random.PRNGKey(0)
    kx, kp = jax.random.split(key)

    B, C, H, W = 2, 16, 16, 16           # H, W need NOT be multiples of local_size
    x = jax.random.normal(kx, (B, C, H, W), jnp.float32)
    conv_w, conv_local_w, k = init_conv_weights(kp, in_size=C)
    ls, lw = 5, 0.5

    out = jax.block_until_ready(
        mlca_forward(x, conv_w, conv_local_w, local_size=ls, local_weight=lw))
    assert out.shape == (B, C, H, W) and out.dtype == x.dtype
    assert bool(jnp.all(jnp.isfinite(out)))

    ref = mlca_reference(x, conv_w, conv_local_w, ls, lw)
    err = float(jnp.max(jnp.abs(out - ref)))
    assert err < 1e-3, f"f32 mismatch vs reference: max abs err {err}"

    # Native-dtype path: bf16 feature map streamed through both kernels.
    xb = x.astype(jnp.bfloat16)
    outb = jax.block_until_ready(
        mlca_forward(xb, conv_w, conv_local_w, local_size=ls, local_weight=lw))
    assert outb.dtype == jnp.bfloat16 and outb.shape == (B, C, H, W)
    errb = float(jnp.max(jnp.abs(outb.astype(jnp.float32) - ref)))
    assert errb < 5e-2, f"bf16 mismatch vs reference: max abs err {errb}"

    print("KERNEL_OK")
</pallas_src>

<mosaic_0001>
module attributes {stable_mosaic.version = 11 : i64} {
  func.func @_pool_kernel(%arg0: i32, %arg1: i32, %arg2: i32, %arg3: memref<1x16x256xf32, #tpu.memory_space<vmem>>, %arg4: memref<26x256xf32, #tpu.memory_space<vmem>>, %arg5: memref<1x16x26xf32, #tpu.memory_space<vmem>>) attributes {dimension_semantics = [#tpu.dimension_semantics<parallel>, #tpu.dimension_semantics<parallel>, #tpu.dimension_semantics<arbitrary>], iteration_bounds = array<i64: 2, 1, 1>, scalar_prefetch = 0 : i64, scratch_operands = 0 : i64, tpu.core_type = #tpu.core_type<tc>, window_params = [{transform_indices = @transform_0, window_bounds = array<i64: 1, 16, 256>}, {transform_indices = @transform_1, window_bounds = array<i64: 26, 256>}, {transform_indices = @transform_2, window_bounds = array<i64: 1, 16, 26>}]} {
    %c0_i32 = arith.constant 0 : i32
    %0 = arith.cmpi eq, %arg2, %c0_i32 : i32
    %1 = arith.extui %0 : i1 to i32
    %c0_i32_0 = arith.constant 0 : i32
    %2 = arith.cmpi ne, %1, %c0_i32_0 : i32
    scf.if %2 {
      %cst_11 = arith.constant 0.000000e+00 : f32
      %13 = vector.broadcast %cst_11 : f32 to vector<16x26xf32>
      %c0_12 = arith.constant 0 : index
      %c0_13 = arith.constant 0 : index
      %c0_14 = arith.constant 0 : index
      %14 = vector.load %arg5[%c0_12, %c0_13, %c0_14] : memref<1x16x26xf32, #tpu.memory_space<vmem>>, vector<1x16x26xf32>
      %15 = vector.shape_cast %14 : vector<1x16x26xf32> to vector<16x26xf32>
      %16 = vector.shape_cast %13 : vector<16x26xf32> to vector<1x16x26xf32>
      tpu.vector_store %arg5[%c0_12, %c0_13, %c0_14], %16 {strides = array<i32>} : memref<1x16x26xf32, #tpu.memory_space<vmem>>, vector<1x16x26xf32>,
    } else {
    }
    %c0 = arith.constant 0 : index
    %c0_1 = arith.constant 0 : index
    %c0_2 = arith.constant 0 : index
    %3 = vector.load %arg3[%c0, %c0_1, %c0_2] : memref<1x16x256xf32, #tpu.memory_space<vmem>>, vector<1x16x256xf32>
    %4 = vector.shape_cast %3 : vector<1x16x256xf32> to vector<16x256xf32>
    %c0_3 = arith.constant 0 : index
    %c0_4 = arith.constant 0 : index
    %5 = vector.load %arg4[%c0_3, %c0_4] : memref<26x256xf32, #tpu.memory_space<vmem>>, vector<26x256xf32>
    %cst = arith.constant dense<0.000000e+00> : vector<16x26xf32>
    %6 = tpu.matmul %4, %5, %cst {dimension_numbers = #tpu.dot_dimension_numbers<[1], [1], [0], [0], [0, 0, 1, 0], [], []>, precision = #tpu.contract_precision<fp32>} : vector<16x256xf32>, vector<26x256xf32>, vector<16x26xf32> -> vector<16x26xf32>
    %c0_5 = arith.constant 0 : index
    %c0_6 = arith.constant 0 : index
    %c0_7 = arith.constant 0 : index
    %7 = vector.load %arg5[%c0_5, %c0_6, %c0_7] : memref<1x16x26xf32, #tpu.memory_space<vmem>>, vector<1x16x26xf32>
    %8 = vector.shape_cast %7 : vector<1x16x26xf32> to vector<16x26xf32>
    %9 = arith.addf %8, %6 : vector<16x26xf32>
    %c0_8 = arith.constant 0 : index
    %c0_9 = arith.constant 0 : index
    %c0_10 = arith.constant 0 : index
    %10 = vector.load %arg5[%c0_8, %c0_9, %c0_10] : memref<1x16x26xf32, #tpu.memory_space<vmem>>, vector<1x16x26xf32>
    %11 = vector.shape_cast %10 : vector<1x16x26xf32> to vector<16x26xf32>
    %12 = vector.shape_cast %9 : vector<16x26xf32> to vector<1x16x26xf32>
    tpu.vector_store %arg5[%c0_8, %c0_9, %c0_10], %12 {strides = array<i32>} : memref<1x16x26xf32, #tpu.memory_space<vmem>>, vector<1x16x26xf32>,
    return
  }
  func.func @transform_0(%arg0: i32, %arg1: i32, %arg2: i32) -> (i32, i32, i32) {
    %c0_i32 = arith.constant 0 : i32
    return %arg0, %arg1, %arg2 : i32, i32, i32
  }
  func.func @transform_1(%arg0: i32, %arg1: i32, %arg2: i32) -> (i32, i32) {
    %c0_i32 = arith.constant 0 : i32
    %c0_i32_0 = arith.constant 0 : i32
    return %c0_i32, %arg2 : i32, i32
  }
  func.func @transform_2(%arg0: i32, %arg1: i32, %arg2: i32) -> (i32, i32, i32) {
    %c0_i32 = arith.constant 0 : i32
    %c0_i32_0 = arith.constant 0 : i32
    return %arg0, %arg1, %c0_i32 : i32, i32, i32
  }
}

module attributes {stable_mosaic.version = 11 : i64} {
  func.func @_conv1d_kernel(%arg0: memref<3xf32, #tpu.memory_space<smem>>, %arg1: memref<2x18xf32, #tpu.memory_space<vmem>>, %arg2: memref<2x16xf32, #tpu.memory_space<vmem>>) attributes {dimension_semantics = [], scalar_prefetch = 0 : i64, scratch_operands = 0 : i64, tpu.core_type = #tpu.core_type<tc>} {
    %c0 = arith.constant 0 : index
    %0 = memref.load %arg0[%c0] : memref<3xf32, #tpu.memory_space<smem>>
    %c0_0 = arith.constant 0 : index
    %c0_1 = arith.constant 0 : index
    %1 = vector.load %arg1[%c0_0, %c0_1] : memref<2x18xf32, #tpu.memory_space<vmem>>, vector<2x16xf32>
    %2 = vector.broadcast %0 : f32 to vector<2x16xf32>
    %3 = arith.mulf %2, %1 : vector<2x16xf32>
    %c1 = arith.constant 1 : index
    %4 = memref.load %arg0[%c1] : memref<3xf32, #tpu.memory_space<smem>>
    %c0_2 = arith.constant 0 : index
    %c1_3 = arith.constant 1 : index
    %5 = vector.load %arg1[%c0_2, %c1_3] : memref<2x18xf32, #tpu.memory_space<vmem>>, vector<2x16xf32>
    %6 = vector.broadcast %4 : f32 to vector<2x16xf32>
    %7 = arith.mulf %6, %5 : vector<2x16xf32>
    %8 = arith.addf %3, %7 : vector<2x16xf32>
    %c2 = arith.constant 2 : index
    %9 = memref.load %arg0[%c2] : memref<3xf32, #tpu.memory_space<smem>>
    %c0_4 = arith.constant 0 : index
    %c2_5 = arith.constant 2 : index
    %10 = vector.load %arg1[%c0_4, %c2_5] : memref<2x18xf32, #tpu.memory_space<vmem>>, vector<2x16xf32>
    %11 = vector.broadcast %9 : f32 to vector<2x16xf32>
    %12 = arith.mulf %11, %10 : vector<2x16xf32>
    %13 = arith.addf %8, %12 : vector<2x16xf32>
    %c0_6 = arith.constant 0 : index
    %c0_7 = arith.constant 0 : index
    %14 = vector.load %arg2[%c0_6, %c0_7] : memref<2x16xf32, #tpu.memory_space<vmem>>, vector<2x16xf32>
    tpu.vector_store %arg2[%c0_6, %c0_7], %13 {strides = array<i32>} : memref<2x16xf32, #tpu.memory_space<vmem>>, vector<2x16xf32>,
    return
  }
}

module attributes {stable_mosaic.version = 11 : i64} {
  func.func @_conv1d_kernel(%arg0: memref<3xf32, #tpu.memory_space<smem>>, %arg1: memref<2x402xf32, #tpu.memory_space<vmem>>, %arg2: memref<2x400xf32, #tpu.memory_space<vmem>>) attributes {dimension_semantics = [], scalar_prefetch = 0 : i64, scratch_operands = 0 : i64, tpu.core_type = #tpu.core_type<tc>} {
    %c0 = arith.constant 0 : index
    %0 = memref.load %arg0[%c0] : memref<3xf32, #tpu.memory_space<smem>>
    %c0_0 = arith.constant 0 : index
    %c0_1 = arith.constant 0 : index
    %1 = vector.load %arg1[%c0_0, %c0_1] : memref<2x402xf32, #tpu.memory_space<vmem>>, vector<2x400xf32>
    %2 = vector.broadcast %0 : f32 to vector<2x400xf32>
    %3 = arith.mulf %2, %1 : vector<2x400xf32>
    %c1 = arith.constant 1 : index
    %4 = memref.load %arg0[%c1] : memref<3xf32, #tpu.memory_space<smem>>
    %c0_2 = arith.constant 0 : index
    %c1_3 = arith.constant 1 : index
    %5 = vector.load %arg1[%c0_2, %c1_3] : memref<2x402xf32, #tpu.memory_space<vmem>>, vector<2x400xf32>
    %6 = vector.broadcast %4 : f32 to vector<2x400xf32>
    %7 = arith.mulf %6, %5 : vector<2x400xf32>
    %8 = arith.addf %3, %7 : vector<2x400xf32>
    %c2 = arith.constant 2 : index
    %9 = memref.load %arg0[%c2] : memref<3xf32, #tpu.memory_space<smem>>
    %c0_4 = arith.constant 0 : index
    %c2_5 = arith.constant 2 : index
    %10 = vector.load %arg1[%c0_4, %c2_5] : memref<2x402xf32, #tpu.memory_space<vmem>>, vector<2x400xf32>
    %11 = vector.broadcast %9 : f32 to vector<2x400xf32>
    %12 = arith.mulf %11, %10 : vector<2x400xf32>
    %13 = arith.addf %8, %12 : vector<2x400xf32>
    %c0_6 = arith.constant 0 : index
    %c0_7 = arith.constant 0 : index
    %14 = vector.load %arg2[%c0_6, %c0_7] : memref<2x400xf32, #tpu.memory_space<vmem>>, vector<2x400xf32>
    tpu.vector_store %arg2[%c0_6, %c0_7], %13 {strides = array<i32>} : memref<2x400xf32, #tpu.memory_space<vmem>>, vector<2x400xf32>,
    return
  }
}

module attributes {stable_mosaic.version = 11 : i64} {
  func.func @_apply_kernel(%arg0: i32, %arg1: i32, %arg2: i32, %arg3: memref<1x16x256xf32, #tpu.memory_space<vmem>>, %arg4: memref<1x16x25xf32, #tpu.memory_space<vmem>>, %arg5: memref<25x256xf32, #tpu.memory_space<vmem>>, %arg6: memref<1x16x256xf32, #tpu.memory_space<vmem>>) attributes {dimension_semantics = [#tpu.dimension_semantics<parallel>, #tpu.dimension_semantics<parallel>, #tpu.dimension_semantics<parallel>], iteration_bounds = array<i64: 2, 1, 1>, scalar_prefetch = 0 : i64, scratch_operands = 0 : i64, tpu.core_type = #tpu.core_type<tc>, window_params = [{transform_indices = @transform_0, window_bounds = array<i64: 1, 16, 256>}, {transform_indices = @transform_1, window_bounds = array<i64: 1, 16, 25>}, {transform_indices = @transform_2, window_bounds = array<i64: 25, 256>}, {transform_indices = @transform_3, window_bounds = array<i64: 1, 16, 256>}]} {
    %c0 = arith.constant 0 : index
    %c0_0 = arith.constant 0 : index
    %c0_1 = arith.constant 0 : index
    %0 = vector.load %arg3[%c0, %c0_0, %c0_1] : memref<1x16x256xf32, #tpu.memory_space<vmem>>, vector<1x16x256xf32>
    %1 = vector.shape_cast %0 : vector<1x16x256xf32> to vector<16x256xf32>
    %c0_2 = arith.constant 0 : index
    %c0_3 = arith.constant 0 : index
    %c0_4 = arith.constant 0 : index
    %2 = vector.load %arg4[%c0_2, %c0_3, %c0_4] : memref<1x16x25xf32, #tpu.memory_space<vmem>>, vector<1x16x25xf32>
    %3 = vector.shape_cast %2 : vector<1x16x25xf32> to vector<16x25xf32>
    %c0_5 = arith.constant 0 : index
    %c0_6 = arith.constant 0 : index
    %4 = vector.load %arg5[%c0_5, %c0_6] : memref<25x256xf32, #tpu.memory_space<vmem>>, vector<25x256xf32>
    %cst = arith.constant dense<0.000000e+00> : vector<16x256xf32>
    %5 = tpu.matmul %3, %4, %cst {dimension_numbers = #tpu.dot_dimension_numbers<[1], [0], [0], [1], [0, 0, 1, 1], [], []>, precision = #tpu.contract_precision<fp32>} : vector<16x25xf32>, vector<25x256xf32>, vector<16x256xf32> -> vector<16x256xf32>
    %6 = arith.mulf %1, %5 : vector<16x256xf32>
    %c0_7 = arith.constant 0 : index
    %c0_8 = arith.constant 0 : index
    %c0_9 = arith.constant 0 : index
    %7 = vector.load %arg6[%c0_7, %c0_8, %c0_9] : memref<1x16x256xf32, #tpu.memory_space<vmem>>, vector<1x16x256xf32>
    %8 = vector.shape_cast %7 : vector<1x16x256xf32> to vector<16x256xf32>
    %9 = vector.shape_cast %6 : vector<16x256xf32> to vector<1x16x256xf32>
    tpu.vector_store %arg6[%c0_7, %c0_8, %c0_9], %9 {strides = array<i32>} : memref<1x16x256xf32, #tpu.memory_space<vmem>>, vector<1x16x256xf32>,
    return
  }
  func.func @transform_0(%arg0: i32, %arg1: i32, %arg2: i32) -> (i32, i32, i32) {
    %c0_i32 = arith.constant 0 : i32
    return %arg0, %arg1, %arg2 : i32, i32, i32
  }
  func.func @transform_1(%arg0: i32, %arg1: i32, %arg2: i32) -> (i32, i32, i32) {
    %c0_i32 = arith.constant 0 : i32
    %c0_i32_0 = arith.constant 0 : i32
    return %arg0, %arg1, %c0_i32 : i32, i32, i32
  }
  func.func @transform_2(%arg0: i32, %arg1: i32, %arg2: i32) -> (i32, i32) {
    %c0_i32 = arith.constant 0 : i32
    %c0_i32_0 = arith.constant 0 : i32
    return %c0_i32, %arg2 : i32, i32
  }
  func.func @transform_3(%arg0: i32, %arg1: i32, %arg2: i32) -> (i32, i32, i32) {
    %c0_i32 = arith.constant 0 : i32
    return %arg0, %arg1, %arg2 : i32, i32, i32
  }
}

</mosaic_0001>

<llo_original>
// kernel: mlca_forward.6
$region0: #{mlca_forward.6}
  #allocation0 [shape = 'u32[]', space=smem, size = 0x4, offset = 0x4, fixed_abs, tag = 'smem constant byte address 0x4 - core index']
  #allocation1 [shape = 'u32[144,128]{1,0:T(1,128)}', space=vmem, size = 0x12000, scoped, tag = 'internal scratch']
  %s0 = inlined_call_operand.vmem [shape: f32[3], index: 0, kind: input, shape index: {}]
  %s1 = inlined_call_operand.vmem [shape: f32[2,18], index: 1, kind: input, shape index: {}]
  %s2 = inlined_call_operand.vmem [shape: f32[2,16], index: 2, kind: output, shape index: {}]
  %s3 = sld [smem:[#allocation0]]
  $region22: #{mlca_forward.6} parent=0
    _
  %s5 = ssub.s32 1, %s3
  %s6 = scalar_select 0, %s5, %s3
  $region1: #{mlca_forward.6} parent=0
    #allocation2 [shape = 'u8[512]{0}', space=smem, size = 0x200, scoped, tag = 'input window, operand 0, single buffered']
    #allocation3 [shape = 's32[1]{0}', space=sflag, size = 0x4, scoped, tag = 'scoped memory for mlca_forward.6']
    %7 = vsyncpa [#allocation3], 0
    // Predicated region
    $region2: #{mlca_forward.6} parent=1 // pred_check
      _
    $region3: #{mlca_forward.6} parent=1 // pred_check_branch
      %9 = sbr.rel (0) target = $region5
    $region4: #{mlca_forward.6} parent=1 // pred_region
      %s11 = ssub.s32 16, 16
      %12 = vsyncadd [#allocation3], %s11
      %s14 = sshll.u32 %s0, 4
      %s15 = int_to_ptr.vmem [resolvable:$true] %s14
      %17 = dma.vmem_to_smem %s15, 16, [#allocation2], [#allocation3]
    $region5: #{mlca_forward.6} parent=1 // pred_fallthru
      _
    // Predicated region
    $region6: #{mlca_forward.6} parent=1 // pred_check
      _
    $region7: #{mlca_forward.6} parent=1 // pred_check_branch
      %19 = sbr.rel (0) target = $region9
    $region8: #{mlca_forward.6} parent=1 // pred_region
      _
    $region9: #{mlca_forward.6} parent=1 // pred_fallthru
      _
    // Predicated region
    $region10: #{mlca_forward.6} parent=1 // pred_check
      _
    $region11: #{mlca_forward.6} parent=1 // pred_check_branch
      %21 = sbr.rel (0) target = $region13
    $region12: #{mlca_forward.6} parent=1 // pred_region
      %22 = dma.done [#allocation3], 16
    $region13: #{mlca_forward.6} parent=1 // pred_fallthru
      _
    %23 = sfence
    %s24 = sld [smem:[#allocation2]]
    %v25 = vld [vmem:[%s1] sm:$0x3]
    %v26 = vstv %s24
    %v27 = vmul.f32 %v26, %v25
    %s28 = sld [smem:[#allocation2 + $0x1]]
    %v29 = vstv %s28
    %v30 = vmul.f32 %v29, %v25
    %32 = vrot.lane.b32.xlu0 %v30, 127
    %v33 = vpop.permute.xlu0 %32
    %v35 = vadd.f32 %v27, %v33
    %s36 = sld [smem:[#allocation2 + $0x2]]
    %v37 = vstv %s36
    %v38 = vmul.f32 %v37, %v25
    %40 = vrot.lane.b32.xlu0 %v38, 126
    %v41 = vpop.permute.xlu0 %40
    %v43 = vadd.f32 %v35, %v41
    %vm44 = vcmask 123904
    %45 = vst.msk [vmem:[%s2] sm:$0x3] %vm44, %v43
    // Predicated region
    $region14: #{mlca_forward.6} parent=1 // pred_check
      _
    $region15: #{mlca_forward.6} parent=1 // pred_check_branch
      %47 = sbr.rel (0) target = $region17
    $region16: #{mlca_forward.6} parent=1 // pred_region
      _
    $region17: #{mlca_forward.6} parent=1 // pred_fallthru
      _
    // Predicated region
    $region18: #{mlca_forward.6} parent=1 // pred_check
      _
    $region19: #{mlca_forward.6} parent=1 // pred_check_branch
      %49 = sbr.rel (0) target = $region21
    $region20: #{mlca_forward.6} parent=1 // pred_region
      _
    $region21: #{mlca_forward.6} parent=1 // pred_fallthru
      _
    %50 = vsyncpa [#allocation3], 1

// kernel: mlca_forward.4
$region0: #{mlca_forward.4}
  #allocation0 [shape = 'u32[]', space=smem, size = 0x4, offset = 0x4, fixed_abs, tag = 'smem constant byte address 0x4 - core index']
  #allocation1 [shape = 'u32[144,128]{1,0:T(1,128)}', space=vmem, size = 0x12000, scoped, tag = 'internal scratch']
  %s0 = inlined_call_operand.hbm [shape: f32[2,16,256], index: 0, kind: input, shape index: {}]
  %s1 = inlined_call_operand.hbm [shape: f32[26,256], index: 1, kind: input, shape index: {}]
  %s2 = inlined_call_operand.hbm [shape: f32[2,16,26], index: 2, kind: output, shape index: {}]
  %s3 = sld [smem:[#allocation0]]
  $region53: #{mlca_forward.4} parent=0
    _
  %s5 = ssub.s32 1, %s3
  %s6 = scalar_select 0, %s5, %s3
  $region1: #{mlca_forward.4} parent=0
    #allocation2 [shape = 'u8[32768]{0}', space=vmem, size = 0x8000, scoped, tag = 'input window, operand 0']
    #allocation3 [shape = 's32[2]{0}', space=sflag, size = 0x8, scoped, tag = 'scoped memory for mlca_forward.4']
    #allocation4 [shape = 's32[2]{0}', space=sflag, size = 0x8, scoped, tag = 'scoped memory for mlca_forward.4']
    #allocation5 [shape = 'u8[32768]{0}', space=vmem, size = 0x8000, scoped, tag = 'input window, operand 1, single buffered']
    #allocation6 [shape = 's32[1]{0}', space=sflag, size = 0x4, scoped, tag = 'scoped memory for mlca_forward.4']
    #allocation7 [shape = 'u8[16384]{0}', space=vmem, size = 0x4000, scoped, tag = 'output window, operand 0']
    %7 = vsyncpa [#allocation3], 0
    %s8 = scalar_lea.sflag [#allocation3], 1
    %9 = vsyncpa %s8, 0
    %10 = vsyncpa [#allocation6], 0
    %11 = vsyncpa [#allocation4], 0
    %s12 = scalar_lea.sflag [#allocation4], 1
    %13 = vsyncpa %s12, 0
    loop: start=0, step=1, limit=4
    $region2: #{mlca_forward.4} parent=1 // loop_pre_header
      _
    $region3: #{mlca_forward.4} parent=1 // loop_header
      %s15 = sphi 0, %s19
      %p16 = scmp.ge.s32.totalorder %s15, 4
      %s22 = sphi 0, %s41
      %s23 = sphi 0, %s37
      %s24 = sphi 0, %s33
      %s25 = sphi 0, %s22
      %s26 = sphi 0, %s23
      %s27 = sphi 0, %s24
      %s28 = sphi 0, %s25
      %s29 = sphi 0, %s26
      %s30 = sphi 0, %s27
      %s48 = sphi 0, %s50
      %s51 = sphi 0, %s48
      %s52 = sphi 0, %s51
      %s68 = sphi 0, %s52
      %s74 = sphi 0, %s76
      %s77 = sphi 0, %s74
      %s78 = sphi 0, %s77
      %s94 = sphi 0, %s78
      %s102 = sphi 0, %s104
      %s105 = sphi 0, %s102
      %s106 = sphi 0, %s105
      %s122 = sphi 0, %s106
    $region4: #{mlca_forward.4} parent=1 // loop_header_branch
      %18 = sbr.rel (%p16) target = $region8
    $region5: #{mlca_forward.4} parent=1 // loop_body
      %s20 = ssub.s32 %s15, 1
      %s21 = ssub.s32 %s15, 2
      %s31 = sadd.s32 1, %s24
      %p32 = scmp.ge.s32.totalorder %s31, 1
      %s33 = scalar_select %p32, 0, %s31
      %s34 = sadd.s32 1, %s23
      %s35 = scalar_select %p32, %s34, %s23
      %p36 = scmp.ge.s32.totalorder %s35, 1
      %s37 = scalar_select %p36, 0, %s35
      %s38 = sadd.s32 1, %s22
      %s39 = scalar_select %p36, %s38, %s22
      %p40 = scmp.ge.s32.totalorder %s39, 2
      %s41 = scalar_select %p40, 0, %s39
      %s42 = ssub.s32 %s22, %s41
      %s43 = ssub.s32 %s23, %s37
      %s44 = sor.u32 %s42, %s43
      %s45 = ssub.s32 %s24, %s33
      %s46 = sor.u32 %s44, %s45
      %p47 = scmp.eq.s32.totalorder %s46, 0
      %s49 = sadd.s32 %s48, 1
      %s50 = scalar_select %p47, %s48, %s49
      %p53 = pneg %p47
      %p54 = scmp.eq.s32.totalorder %s15, 1
      %p55 = por %p53, %p54
      %p56 = scmp.ne.s32.totalorder %s48, %s51
      %p57 = scmp.eq.s32.totalorder %s15, 0
      %p58 = por %p56, %p57
      %p59 = scmp.ne.s32.totalorder %s48, %s51
      %p60 = scmp.eq.s32.totalorder %s20, 1
      %p61 = por %p59, %p60
      %p62 = scmp.ne.s32.totalorder %s51, %s52
      %p63 = scmp.eq.s32.totalorder %s20, 0
      %p64 = por %p62, %p63
      %p65 = scmp.ne.s32.totalorder %s51, %s52
      %p66 = scmp.eq.s32.totalorder %s21, 1
      %p67 = por %p65, %p66
      %p69 = scmp.ne.s32.totalorder %s52, %s68
      %p70 = scmp.eq.s32.totalorder %s21, 0
      %p71 = por %p69, %p70
      %s72 = ssub.s32 %s24, %s33
      %p73 = scmp.eq.s32.totalorder %s72, 0
      %s75 = sadd.s32 %s74, 1
      %s76 = scalar_select %p73, %s74, %s75
      %p79 = pneg %p73
      %p80 = scmp.eq.s32.totalorder %s15, 1
      %p81 = por %p79, %p80
      %p82 = scmp.ne.s32.totalorder %s74, %s77
      %p83 = scmp.eq.s32.totalorder %s15, 0
      %p84 = por %p82, %p83
      %p85 = scmp.ne.s32.totalorder %s74, %s77
      %p86 = scmp.eq.s32.totalorder %s20, 1
      %p87 = por %p85, %p86
      %p88 = scmp.ne.s32.totalorder %s77, %s78
      %p89 = scmp.eq.s32.totalorder %s20, 0
      %p90 = por %p88, %p89
      %p91 = scmp.ne.s32.totalorder %s77, %s78
      %p92 = scmp.eq.s32.totalorder %s21, 1
      %p93 = por %p91, %p92
      %p95 = scmp.ne.s32.totalorder %s78, %s94
      %p96 = scmp.eq.s32.totalorder %s21, 0
      %p97 = por %p95, %p96
      %s98 = ssub.s32 %s22, %s41
      %s99 = ssub.s32 %s23, %s37
      %s100 = sor.u32 %s98, %s99
      %p101 = scmp.eq.s32.totalorder %s100, 0
      %s103 = sadd.s32 %s102, 1
      %s104 = scalar_select %p101, %s102, %s103
      %p107 = pneg %p101
      %p108 = scmp.eq.s32.totalorder %s15, 1
      %p109 = por %p107, %p108
      %p110 = scmp.ne.s32.totalorder %s102, %s105
      %p111 = scmp.eq.s32.totalorder %s15, 0
      %p112 = por %p110, %p111
      %p113 = scmp.ne.s32.totalorder %s102, %s105
      %p114 = scmp.eq.s32.totalorder %s20, 1
      %p115 = por %p113, %p114
      %p116 = scmp.ne.s32.totalorder %s105, %s106
      %p117 = scmp.eq.s32.totalorder %s20, 0
      %p118 = por %p116, %p117
      %p119 = scmp.ne.s32.totalorder %s105, %s106
      %p120 = scmp.eq.s32.totalorder %s21, 1
      %p121 = por %p119, %p120
      %p123 = scmp.ne.s32.totalorder %s106, %s122
      %p124 = scmp.eq.s32.totalorder %s21, 0
      %p125 = por %p123, %p124
      %p126 = scmp.le.s32.totalorder 1, %s15
      %p127 = scmp.lt.s32.totalorder %s15, 3
      %p128 = pnand %p126, %p127
      %p129 = pneg %p128
      // Predicated region
      $region9: #{mlca_forward.4} parent=5 // pred_check
        _
      $region10: #{mlca_forward.4} parent=5 // pred_check_branch
        %131 = sbr.rel (%p128) target = $region12
      $region11: #{mlca_forward.4} parent=5 // pred_region
        %s132 = ssub.s32 %s15, 1
        // Predicated region
        $region13: #{mlca_forward.4} parent=11 // pred_check
          %p133 = pneg %p90
        $region14: #{mlca_forward.4} parent=11 // pred_check_branch
          %135 = sbr.rel (%p133) target = $region16
        $region15: #{mlca_forward.4} parent=11 // pred_region
          %s136 = smul.u32 2, %s27
          %s138 = ssub.s32 1024, 1024
          %139 = vsyncadd [#allocation6], %s138
          %s140 = smul.addr %s136, 128
          %s141 = scalar_lea.hbm %s1, %s140
          %s142 = sshll.u32 [#allocation5], 4
          %s143 = int_to_ptr.vmem [resolvable:$true] %s142
          %148 = dma.hbm_to_vmem [thread:$0]  %s141, 1024, %s143, [#allocation6], 256, 256, 16
        $region16: #{mlca_forward.4} parent=11 // pred_fallthru
          _
      $region12: #{mlca_forward.4} parent=5 // pred_fallthru
        _
      %p149 = scmp.lt.s32.totalorder %s15, 2
      // Predicated region
      $region17: #{mlca_forward.4} parent=5 // pred_check
        %p150 = pneg %p149
      $region18: #{mlca_forward.4} parent=5 // pred_check_branch
        %152 = sbr.rel (%p150) target = $region20
      $region19: #{mlca_forward.4} parent=5 // pred_region
        // Predicated region
        $region21: #{mlca_forward.4} parent=19 // pred_check
          %p153 = pneg %p58
        $region22: #{mlca_forward.4} parent=19 // pred_check_branch
          %155 = sbr.rel (%p153) target = $region24
        $region23: #{mlca_forward.4} parent=19 // pred_region
          %s156 = sand.u32 %s48, 1
          %s157 = scalar_lea.sflag [#allocation3], %s156
          %s158 = sand.u32 %s48, 1
          %s159 = smul.addr %s158, 32
          %s160 = scalar_lea.vmem [#allocation2], %s159
          %s161 = smul.u32 2, %s23
          %s162 = smul.u32 2, %s24
          %s164 = ssub.s32 512, 512
          %165 = vsyncadd %s157, %s164
          %s166 = smul.addr %s161, 2
          %s167 = sadd.s32 %s162, %s166
          %s168 = smul.addr %s22, 4
          %s169 = sadd.s32 %s167, %s168
          %s170 = smul.addr %s169, 128
          %s171 = scalar_lea.hbm %s0, %s170
          %s172 = sshll.u32 %s160, 4
          %s173 = int_to_ptr.vmem [resolvable:$true] %s172
          %178 = dma.hbm_to_vmem [thread:$0]  %s171, 512, %s173, %s157, 256, 256, 16
        $region24: #{mlca_forward.4} parent=19 // pred_fallthru
          _
      $region20: #{mlca_forward.4} parent=5 // pred_fallthru
        _
      %p179 = scmp.le.s32.totalorder 1, %s15
      %p180 = scmp.lt.s32.totalorder %s15, 3
      %p181 = pnand %p179, %p180
      %p182 = pneg %p181
      // Predicated region
      $region25: #{mlca_forward.4} parent=5 // pred_check
        _
      $region26: #{mlca_forward.4} parent=5 // pred_check_branch
        %184 = sbr.rel (%p181) target = $region28
      $region27: #{mlca_forward.4} parent=5 // pred_region
        %s185 = ssub.s32 %s15, 1
        %s186 = sand.u32 %s51, 1
        %s187 = scalar_lea.sflag [#allocation3], %s186
        %s188 = sand.u32 %s51, 1
        %s189 = smul.addr %s188, 32
        %s190 = scalar_lea.vmem [#allocation2], %s189
        // Predicated region
        $region29: #{mlca_forward.4} parent=27 // pred_check
          %p191 = pneg %p64
        $region30: #{mlca_forward.4} parent=27 // pred_check_branch
          %193 = sbr.rel (%p191) target = $region32
        $region31: #{mlca_forward.4} parent=27 // pred_region
          %194 = dma.done %s187, 512
        $region32: #{mlca_forward.4} parent=27 // pred_fallthru
          _
        // Predicated region
        $region33: #{mlca_forward.4} parent=27 // pred_check
          %p195 = pneg %p90
        $region34: #{mlca_forward.4} parent=27 // pred_check_branch
          %197 = sbr.rel (%p195) target = $region36
        $region35: #{mlca_forward.4} parent=27 // pred_region
          %198 = dma.done [#allocation6], 1024
        $region36: #{mlca_forward.4} parent=27 // pred_fallthru
          _
        %s199 = sand.u32 %s51, 1
        %s200 = scalar_lea.sflag [#allocation3], %s199
        %s201 = sand.u32 %s51, 1
        %s202 = smul.addr %s201, 32
        %s203 = scalar_lea.vmem [#allocation2], %s202
        %p204 = pneg %p64
        %p205 = pneg %p61
        %p206 = pneg %p90
        %p207 = pneg %p87
        %p208 = pneg %p118
        %p209 = pneg %p115
        %s210 = sand.u32 %s105, 1
        %s211 = scalar_lea.sflag [#allocation4], %s210
        %s212 = sand.u32 %s105, 1
        %s213 = smul.addr %s212, 16
        %s214 = scalar_lea.vmem [#allocation7], %s213
        %s215 = smul.u32 2, %s26
        %s216 = smul.u32 2, %s27
        %s217 = smul.u32 2, %s27
        %s218 = smul.u32 2, %s26
        %p219 = scmp.eq.s32.totalorder %s27, 0
        // Predicated region
        $region37: #{mlca_forward.4} parent=27 // pred_check
          %p220 = pneg %p219
        $region38: #{mlca_forward.4} parent=27 // pred_check_branch
          %222 = sbr.rel (%p220) target = $region40
        $region39: #{mlca_forward.4} parent=27 // pred_region
          %vm223 = vcmask 211968
          %224 = vst.msk [vmem:[%s214] sm:$0xff] %vm223, 0.0
          %225 = vst.msk [vmem:[%s214 + $0x8] sm:$0xff] %vm223, 0.0
        $region40: #{mlca_forward.4} parent=27 // pred_fallthru
          _
        %v226 = vld [vmem:[%s190] sm:$0xff]
        %v227 = vld [vmem:[%s190 + $0x8] sm:$0xff]
        %v228 = vld [vmem:[%s190 + $0x10] sm:$0xff]
        %v229 = vld [vmem:[%s190 + $0x18] sm:$0xff]
        %v230 = vld [vmem:[#allocation5] sm:$0xff]
        %v231 = vld [vmem:[#allocation5 + $0x8] sm:$0xff]
        %v232 = vld [vmem:[#allocation5 + $0x10] sm:$0xff]
        %v233 = vld [vmem:[#allocation5 + $0x18] sm:$0xff]
        %v234 = vld [vmem:[#allocation5 + $0x20] sm:$0xff]
        %v235 = vld [vmem:[#allocation5 + $0x28] sm:$0xff]
        %v236 = vld [vmem:[#allocation5 + $0x30] sm:$0x3]
        %v237 = vld [vmem:[#allocation5 + $0x38] sm:$0x3]
        %v238 = vand.u32 %v231, 4294901760
        %239 = vmatprep.subr.mxu0 %v238
        %v240 = vand.u32 %v230, 4294901760
        %241 = vmatpush1.xpose.msra.mxu0 %v240
        %v242 = vand.u32 %v233, 4294901760
        %243 = vmatprep.subr.mxu0 %v242
        %v244 = vand.u32 %v232, 4294901760
        %245 = vmatpush1.xpose.msra.mxu0 %v244
        %v246 = vand.u32 %v235, 4294901760
        %247 = vmatprep.subr.mxu0 %v246
        %v248 = vand.u32 %v234, 4294901760
        %249 = vmatpush1.xpose.msra.mxu0 %v248
        %v250 = vand.u32 %v237, 4294901760
        %251 = vmatprep.subr.mxu0 %v250
        %v252 = vand.u32 %v236, 4294901760
        %253 = vmatpush1.xpose.msra.mxu0 %v252
        %254 = vmatprep.subr.mxu0 0.0
        %255 = vmatpush1.xpose.msra.mxu0 0.0
        %256 = vmatprep.subr.mxu0 0.0
        %257 = vmatpush1.xpose.msra.mxu0 0.0
        %258 = vmatprep.subr.mxu0 0.0
        %259 = vmatpush1.xpose.msra.mxu0 0.0
        %260 = vmatprep.subr.mxu0 0.0
        %261 = vmatpush1.xpose.msra.mxu0 0.0
        %262 = vmatprep.subr.mxu0 0.0
        %263 = vmatpush1.xpose.msra.mxu0 0.0
        %264 = vmatprep.subr.mxu0 0.0
        %265 = vmatpush1.xpose.msra.mxu0 0.0
        %266 = vmatprep.subr.mxu0 0.0
        %267 = vmatpush1.xpose.msra.mxu0 0.0
        %268 = vmatprep.subr.mxu0 0.0
        %269 = vmatpush1.xpose.msra.mxu0 0.0
        %270 = vmatprep.subr.mxu0 0.0
        %271 = vmatpush1.xpose.msra.mxu0 0.0
        %272 = vmatprep.subr.mxu0 0.0
        %273 = vmatpush1.xpose.msra.mxu0 0.0
        %274 = vmatprep.subr.mxu0 0.0
        %275 = vmatpush1.xpose.msra.mxu0 0.0
        %276 = vmatprep.subr.mxu0 0.0
        %277 = vmatpush1.xpose.msra.mxu0 0.0
        %278 = vmatprep.subr.mxu0 0.0
        %279 = vmatpush1.xpose.msra.mxu0 0.0
        %280 = vmatprep.subr.mxu0 0.0
        %281 = vmatpush1.xpose.msra.mxu0 0.0
        %282 = vmatprep.subr.mxu0 0.0
        %283 = vmatpush1.xpose.msra.mxu0 0.0
        %284 = vmatprep.subr.mxu0 0.0
        %285 = vmatpush1.xpose.msra.mxu0 0.0
        %286 = vmatprep.subr.mxu0 0.0
        %287 = vmatpush1.xpose.msra.mxu0 0.0
        %288 = vmatprep.subr.mxu0 0.0
        %289 = vmatpush1.xpose.msra.mxu0 0.0
        %290 = vmatprep.subr.mxu0 0.0
        %291 = vmatpush1.xpose.msra.mxu0 0.0
        %292 = vmatprep.subr.mxu0 0.0
        %293 = vmatpush1.xpose.msra.mxu0 0.0
        %294 = vmatprep.subr.mxu0 0.0
        %295 = vmatpush1.xpose.msra.mxu0 0.0
        %296 = vmatprep.subr.mxu0 0.0
        %297 = vmatpush1.xpose.msra.mxu0 0.0
        %298 = vmatprep.subr.mxu0 0.0
        %299 = vmatpush1.xpose.msra.mxu0 0.0
        %300 = vmatprep.subr.mxu0 0.0
        %301 = vmatpush1.xpose.msra.mxu0 0.0
        %302 = vmatprep.subr.mxu0 0.0
        %303 = vmatpush1.xpose.msra.mxu0 0.0
        %304 = vmatprep.subr.mxu0 0.0
        %305 = vmatpush1.xpose.msra.mxu0 0.0
        %306 = vmatprep.subr.mxu0 0.0
        %307 = vmatpush1.xpose.msra.mxu0 0.0
        %308 = vmatprep.subr.mxu0 0.0
        %309 = vmatpush1.xpose.msra.mxu0 0.0
        %v310 = vand.u32 %v227, 4294901760
        %v311 = vsub.f32 %v227, %v310
        %v312 = vand.u32 %v311, 4294901760
        %v313 = vsub.f32 %v311, %v312
        %v314 = vand.u32 %v313, 4294901760
        %315 = vmatprep.mubr.f32.mxu0 %v314
        %v316 = vand.u32 %v226, 4294901760
        %v317 = vsub.f32 %v226, %v316
        %v318 = vand.u32 %v317, 4294901760
        %v319 = vsub.f32 %v317, %v318
        %v320 = vand.u32 %v319, 4294901760
        %321 = vmatmul.mubr.f32.gmra.mrb[0].mxu0 %v320
        %v322 = vpop.f32.mrb[0].mxu0
        %v323 = vadd.f32 0.0, %v322
        %v324 = vpop.f32.mrb[0].mxu0
        %v325 = vand.u32 %v229, 4294901760
        %v326 = vsub.f32 %v229, %v325
        %v327 = vand.u32 %v326, 4294901760
        %v328 = vsub.f32 %v326, %v327
        %v329 = vand.u32 %v328, 4294901760
        %330 = vmatprep.mubr.f32.mxu0 %v329
        %v331 = vand.u32 %v228, 4294901760
        %v332 = vsub.f32 %v228, %v331
        %v333 = vand.u32 %v332, 4294901760
        %v334 = vsub.f32 %v332, %v333
        %v335 = vand.u32 %v334, 4294901760
        %336 = vmatmul.mubr.f32.gmra.mrb[0].mxu0 %v335
        %v337 = vpop.f32.mrb[0].mxu0
        %v338 = vadd.f32 0.0, %v337
        %v339 = vpop.f32.mrb[0].mxu0
        %340 = vdwg.mxu0
        %v341 = vand.u32 %v231, 4294901760
        %v342 = vsub.f32 %v231, %v341
        %v343 = vand.u32 %v342, 4294901760
        %v344 = vsub.f32 %v342, %v343
        %v345 = vand.u32 %v344, 4294901760
        %346 = vmatprep.subr.mxu0 %v345
        %v347 = vand.u32 %v230, 4294901760
        %v348 = vsub.f32 %v230, %v347
        %v349 = vand.u32 %v348, 4294901760
        %v350 = vsub.f32 %v348, %v349
        %v351 = vand.u32 %v350, 4294901760
        %352 = vmatpush1.xpose.msra.mxu0 %v351
        %v353 = vand.u32 %v233, 4294901760
        %v354 = vsub.f32 %v233, %v353
        %v355 = vand.u32 %v354, 4294901760
        %v356 = vsub.f32 %v354, %v355
        %v357 = vand.u32 %v356, 4294901760
        %358 = vmatprep.subr.mxu0 %v357
        %v359 = vand.u32 %v232, 4294901760
        %v360 = vsub.f32 %v232, %v359
        %v361 = vand.u32 %v360, 4294901760
        %v362 = vsub.f32 %v360, %v361
        %v363 = vand.u32 %v362, 4294901760
        %364 = vmatpush1.xpose.msra.mxu0 %v363
        %v365 = vand.u32 %v235, 4294901760
        %v366 = vsub.f32 %v235, %v365
        %v367 = vand.u32 %v366, 4294901760
        %v368 = vsub.f32 %v366, %v367
        %v369 = vand.u32 %v368, 4294901760
        %370 = vmatprep.subr.mxu0 %v369
        %v371 = vand.u32 %v234, 4294901760
        %v372 = vsub.f32 %v234, %v371
        %v373 = vand.u32 %v372, 4294901760
        %v374 = vsub.f32 %v372, %v373
        %v375 = vand.u32 %v374, 4294901760
        %376 = vmatpush1.xpose.msra.mxu0 %v375
        %v377 = vand.u32 %v237, 4294901760
        %v378 = vsub.f32 %v237, %v377
        %v379 = vand.u32 %v378, 4294901760
        %v380 = vsub.f32 %v378, %v379
        %v381 = vand.u32 %v380, 4294901760
        %382 = vmatprep.subr.mxu0 %v381
        %v383 = vand.u32 %v236, 4294901760
        %v384 = vsub.f32 %v236, %v383
        %v385 = vand.u32 %v384, 4294901760
        %v386 = vsub.f32 %v384, %v385
        %v387 = vand.u32 %v386, 4294901760
        %388 = vmatpush1.xpose.msra.mxu0 %v387
        %389 = vmatprep.subr.mxu0 0.0
        %390 = vmatpush1.xpose.msra.mxu0 0.0
        %391 = vmatprep.subr.mxu0 0.0
        %392 = vmatpush1.xpose.msra.mxu0 0.0
        %393 = vmatprep.subr.mxu0 0.0
        %394 = vmatpush1.xpose.msra.mxu0 0.0
        %395 = vmatprep.subr.mxu0 0.0
        %396 = vmatpush1.xpose.msra.mxu0 0.0
        %397 = vmatprep.subr.mxu0 0.0
        %398 = vmatpush1.xpose.msra.mxu0 0.0
        %399 = vmatprep.subr.mxu0 0.0
        %400 = vmatpush1.xpose.msra.mxu0 0.0
        %401 = vmatprep.subr.mxu0 0.0
        %402 = vmatpush1.xpose.msra.mxu0 0.0
        %403 = vmatprep.subr.mxu0 0.0
        %404 = vmatpush1.xpose.msra.mxu0 0.0
        %405 = vmatprep.subr.mxu0 0.0
        %406 = vmatpush1.xpose.msra.mxu0 0.0
        %407 = vmatprep.subr.mxu0 0.0
        %408 = vmatpush1.xpose.msra.mxu0 0.0
        %409 = vmatprep.subr.mxu0 0.0
        %410 = vmatpush1.xpose.msra.mxu0 0.0
        %411 = vmatprep.subr.mxu0 0.0
        %412 = vmatpush1.xpose.msra.mxu0 0.0
        %413 = vmatprep.subr.mxu0 0.0
        %414 = vmatpush1.xpose.msra.mxu0 0.0
        %415 = vmatprep.subr.mxu0 0.0
        %416 = vmatpush1.xpose.msra.mxu0 0.0
        %417 = vmatprep.subr.mxu0 0.0
        %418 = vmatpush1.xpose.msra.mxu0 0.0
        %419 = vmatprep.subr.mxu0 0.0
        %420 = vmatpush1.xpose.msra.mxu0 0.0
        %421 = vmatprep.subr.mxu0 0.0
        %422 = vmatpush1.xpose.msra.mxu0 0.0
        %423 = vmatprep.subr.mxu0 0.0
        %424 = vmatpush1.xpose.msra.mxu0 0.0
        %425 = vmatprep.subr.mxu0 0.0
        %426 = vmatpush1.xpose.msra.mxu0 0.0
        %427 = vmatprep.subr.mxu0 0.0
        %428 = vmatpush1.xpose.msra.mxu0 0.0
        %429 = vmatprep.subr.mxu0 0.0
        %430 = vmatpush1.xpose.msra.mxu0 0.0
        %431 = vmatprep.subr.mxu0 0.0
        %432 = vmatpush1.xpose.msra.mxu0 0.0
        %433 = vmatprep.subr.mxu0 0.0
        %434 = vmatpush1.xpose.msra.mxu0 0.0
        %435 = vmatprep.subr.mxu0 0.0
        %436 = vmatpush1.xpose.msra.mxu0 0.0
        %437 = vmatprep.subr.mxu0 0.0
        %438 = vmatpush1.xpose.msra.mxu0 0.0
        %439 = vmatprep.subr.mxu0 0.0
        %440 = vmatpush1.xpose.msra.mxu0 0.0
        %441 = vmatprep.subr.mxu0 0.0
        %442 = vmatpush1.xpose.msra.mxu0 0.0
        %443 = vmatprep.subr.mxu0 0.0
        %444 = vmatpush1.xpose.msra.mxu0 0.0
        %v445 = vand.u32 %v227, 4294901760
        %446 = vmatprep.mubr.f32.mxu0 %v445
        %v447 = vand.u32 %v226, 4294901760
        %448 = vmatmul.mubr.f32.gmra.mrb[0].mxu0 %v447
        %v449 = vpop.f32.mrb[0].mxu0
        %v450 = vadd.f32 %v323, %v449
        %v451 = vpop.f32.mrb[0].mxu0
        %v452 = vand.u32 %v229, 4294901760
        %453 = vmatprep.mubr.f32.mxu0 %v452
        %v454 = vand.u32 %v228, 4294901760
        %455 = vmatmul.mubr.f32.gmra.mrb[0].mxu0 %v454
        %v456 = vpop.f32.mrb[0].mxu0
        %v457 = vadd.f32 %v338, %v456
        %v458 = vpop.f32.mrb[0].mxu0
        %459 = vdwg.mxu0
        %v460 = vand.u32 %v231, 4294901760
        %v461 = vsub.f32 %v231, %v460
        %462 = vmatprep.subr.mxu0 %v461
        %v463 = vand.u32 %v230, 4294901760
        %v464 = vsub.f32 %v230, %v463
        %465 = vmatpush1.xpose.msra.mxu0 %v464
        %v466 = vand.u32 %v233, 4294901760
        %v467 = vsub.f32 %v233, %v466
        %468 = vmatprep.subr.mxu0 %v467
        %v469 = vand.u32 %v232, 4294901760
        %v470 = vsub.f32 %v232, %v469
        %471 = vmatpush1.xpose.msra.mxu0 %v470
        %v472 = vand.u32 %v235, 4294901760
        %v473 = vsub.f32 %v235, %v472
        %474 = vmatprep.subr.mxu0 %v473
        %v475 = vand.u32 %v234, 4294901760
        %v476 = vsub.f32 %v234, %v475
        %477 = vmatpush1.xpose.msra.mxu0 %v476
        %v478 = vand.u32 %v237, 4294901760
        %v479 = vsub.f32 %v237, %v478
        %480 = vmatprep.subr.mxu0 %v479
        %v481 = vand.u32 %v236, 4294901760
        %v482 = vsub.f32 %v236, %v481
        %483 = vmatpush1.xpose.msra.mxu0 %v482
        %484 = vmatprep.subr.mxu0 0.0
        %485 = vmatpush1.xpose.msra.mxu0 0.0
        %486 = vmatprep.subr.mxu0 0.0
        %487 = vmatpush1.xpose.msra.mxu0 0.0
        %488 = vmatprep.subr.mxu0 0.0
        %489 = vmatpush1.xpose.msra.mxu0 0.0
        %490 = vmatprep.subr.mxu0 0.0
        %491 = vmatpush1.xpose.msra.mxu0 0.0
        %492 = vmatprep.subr.mxu0 0.0
        %493 = vmatpush1.xpose.msra.mxu0 0.0
        %494 = vmatprep.subr.mxu0 0.0
        %495 = vmatpush1.xpose.msra.mxu0 0.0
        %496 = vmatprep.subr.mxu0 0.0
        %497 = vmatpush1.xpose.msra.mxu0 0.0
        %498 = vmatprep.subr.mxu0 0.0
        %499 = vmatpush1.xpose.msra.mxu0 0.0
        %500 = vmatprep.subr.mxu0 0.0
        %501 = vmatpush1.xpose.msra.mxu0 0.0
        %502 = vmatprep.subr.mxu0 0.0
        %503 = vmatpush1.xpose.msra.mxu0 0.0
        %504 = vmatprep.subr.mxu0 0.0
        %505 = vmatpush1.xpose.msra.mxu0 0.0
        %506 = vmatprep.subr.mxu0 0.0
        %507 = vmatpush1.xpose.msra.mxu0 0.0
        %508 = vmatprep.subr.mxu0 0.0
        %509 = vmatpush1.xpose.msra.mxu0 0.0
        %510 = vmatprep.subr.mxu0 0.0
        %511 = vmatpush1.xpose.msra.mxu0 0.0
        %512 = vmatprep.subr.mxu0 0.0
        %513 = vmatpush1.xpose.msra.mxu0 0.0
        %514 = vmatprep.subr.mxu0 0.0
        %515 = vmatpush1.xpose.msra.mxu0 0.0
        %516 = vmatprep.subr.mxu0 0.0
        %517 = vmatpush1.xpose.msra.mxu0 0.0
        %518 = vmatprep.subr.mxu0 0.0
        %519 = vmatpush1.xpose.msra.mxu0 0.0
        %520 = vmatprep.subr.mxu0 0.0
        %521 = vmatpush1.xpose.msra.mxu0 0.0
        %522 = vmatprep.subr.mxu0 0.0
        %523 = vmatpush1.xpose.msra.mxu0 0.0
        %524 = vmatprep.subr.mxu0 0.0
        %525 = vmatpush1.xpose.msra.mxu0 0.0
        %526 = vmatprep.subr.mxu0 0.0
        %527 = vmatpush1.xpose.msra.mxu0 0.0
        %528 = vmatprep.subr.mxu0 0.0
        %529 = vmatpush1.xpose.msra.mxu0 0.0
        %530 = vmatprep.subr.mxu0 0.0
        %531 = vmatpush1.xpose.msra.mxu0 0.0
        %532 = vmatprep.subr.mxu0 0.0
        %533 = vmatpush1.xpose.msra.mxu0 0.0
        %534 = vmatprep.subr.mxu0 0.0
        %535 = vmatpush1.xpose.msra.mxu0 0.0
        %536 = vmatprep.subr.mxu0 0.0
        %537 = vmatpush1.xpose.msra.mxu0 0.0
        %538 = vmatprep.subr.mxu0 0.0
        %539 = vmatpush1.xpose.msra.mxu0 0.0
        %v540 = vand.u32 %v227, 4294901760
        %v541 = vsub.f32 %v227, %v540
        %542 = vmatprep.mubr.f32.mxu0 %v541
        %v543 = vand.u32 %v226, 4294901760
        %v544 = vsub.f32 %v226, %v543
        %545 = vmatmul.mubr.f32.gmra.mrb[0].mxu0 %v544
        %v546 = vpop.f32.mrb[0].mxu0
        %v547 = vadd.f32 %v450, %v546
        %v548 = vpop.f32.mrb[0].mxu0
        %v549 = vand.u32 %v229, 4294901760
        %v550 = vsub.f32 %v229, %v549
        %551 = vmatprep.mubr.f32.mxu0 %v550
        %v552 = vand.u32 %v228, 4294901760
        %v553 = vsub.f32 %v228, %v552
        %554 = vmatmul.mubr.f32.gmra.mrb[0].mxu0 %v553
        %v555 = vpop.f32.mrb[0].mxu0
        %v556 = vadd.f32 %v457, %v555
        %v557 = vpop.f32.mrb[0].mxu0
        %558 = vdwg.mxu0
        %v559 = vand.u32 %v231, 4294901760
        %560 = vmatprep.subr.mxu0 %v559
        %v561 = vand.u32 %v230, 4294901760
        %562 = vmatpush1.xpose.msra.mxu0 %v561
        %v563 = vand.u32 %v233, 4294901760
        %564 = vmatprep.subr.mxu0 %v563
        %v565 = vand.u32 %v232, 4294901760
        %566 = vmatpush1.xpose.msra.mxu0 %v565
        %v567 = vand.u32 %v235, 4294901760
        %568 = vmatprep.subr.mxu0 %v567
        %v569 = vand.u32 %v234, 4294901760
        %570 = vmatpush1.xpose.msra.mxu0 %v569
        %v571 = vand.u32 %v237, 4294901760
        %572 = vmatprep.subr.mxu0 %v571
        %v573 = vand.u32 %v236, 4294901760
        %574 = vmatpush1.xpose.msra.mxu0 %v573
        %575 = vmatprep.subr.mxu0 0.0
        %576 = vmatpush1.xpose.msra.mxu0 0.0
        %577 = vmatprep.subr.mxu0 0.0
        %578 = vmatpush1.xpose.msra.mxu0 0.0
        %579 = vmatprep.subr.mxu0 0.0
        %580 = vmatpush1.xpose.msra.mxu0 0.0
        %581 = vmatprep.subr.mxu0 0.0
        %582 = vmatpush1.xpose.msra.mxu0 0.0
        %583 = vmatprep.subr.mxu0 0.0
        %584 = vmatpush1.xpose.msra.mxu0 0.0
        %585 = vmatprep.subr.mxu0 0.0
        %586 = vmatpush1.xpose.msra.mxu0 0.0
        %587 = vmatprep.subr.mxu0 0.0
        %588 = vmatpush1.xpose.msra.mxu0 0.0
        %589 = vmatprep.subr.mxu0 0.0
        %590 = vmatpush1.xpose.msra.mxu0 0.0
        %591 = vmatprep.subr.mxu0 0.0
        %592 = vmatpush1.xpose.msra.mxu0 0.0
        %593 = vmatprep.subr.mxu0 0.0
        %594 = vmatpush1.xpose.msra.mxu0 0.0
        %595 = vmatprep.subr.mxu0 0.0
        %596 = vmatpush1.xpose.msra.mxu0 0.0
        %597 = vmatprep.subr.mxu0 0.0
        %598 = vmatpush1.xpose.msra.mxu0 0.0
        %599 = vmatprep.subr.mxu0 0.0
        %600 = vmatpush1.xpose.msra.mxu0 0.0
        %601 = vmatprep.subr.mxu0 0.0
        %602 = vmatpush1.xpose.msra.mxu0 0.0
        %603 = vmatprep.subr.mxu0 0.0
        %604 = vmatpush1.xpose.msra.mxu0 0.0
        %605 = vmatprep.subr.mxu0 0.0
        %606 = vmatpush1.xpose.msra.mxu0 0.0
        %607 = vmatprep.subr.mxu0 0.0
        %608 = vmatpush1.xpose.msra.mxu0 0.0
        %609 = vmatprep.subr.mxu0 0.0
        %610 = vmatpush1.xpose.msra.mxu0 0.0
        %611 = vmatprep.subr.mxu0 0.0
        %612 = vmatpush1.xpose.msra.mxu0 0.0
        %613 = vmatprep.subr.mxu0 0.0
        %614 = vmatpush1.xpose.msra.mxu0 0.0
        %615 = vmatprep.subr.mxu0 0.0
        %616 = vmatpush1.xpose.msra.mxu0 0.0
        %617 = vmatprep.subr.mxu0 0.0
        %618 = vmatpush1.xpose.msra.mxu0 0.0
        %619 = vmatprep.subr.mxu0 0.0
        %620 = vmatpush1.xpose.msra.mxu0 0.0
        %621 = vmatprep.subr.mxu0 0.0
        %622 = vmatpush1.xpose.msra.mxu0 0.0
        %623 = vmatprep.subr.mxu0 0.0
        %624 = vmatpush1.xpose.msra.mxu0 0.0
        %625 = vmatprep.subr.mxu0 0.0
        %626 = vmatpush1.xpose.msra.mxu0 0.0
        %627 = vmatprep.subr.mxu0 0.0
        %628 = vmatpush1.xpose.msra.mxu0 0.0
        %629 = vmatprep.subr.mxu0 0.0
        %630 = vmatpush1.xpose.msra.mxu0 0.0
        %v631 = vand.u32 %v227, 4294901760
        %v632 = vsub.f32 %v227, %v631
        %v633 = vand.u32 %v632, 4294901760
        %634 = vmatprep.mubr.f32.mxu0 %v633
        %v635 = vand.u32 %v226, 4294901760
        %v636 = vsub.f32 %v226, %v635
        %v637 = vand.u32 %v636, 4294901760
        %638 = vmatmul.mubr.f32.gmra.mrb[0].mxu0 %v637
        %v639 = vpop.f32.mrb[0].mxu0
        %v640 = vadd.f32 %v547, %v639
        %v641 = vpop.f32.mrb[0].mxu0
        %v642 = vand.u32 %v229, 4294901760
        %v643 = vsub.f32 %v229, %v642
        %v644 = vand.u32 %v643, 4294901760
        %645 = vmatprep.mubr.f32.mxu0 %v644
        %v646 = vand.u32 %v228, 4294901760
        %v647 = vsub.f32 %v228, %v646
        %v648 = vand.u32 %v647, 4294901760
        %649 = vmatmul.mubr.f32.gmra.mrb[0].mxu0 %v648
        %v650 = vpop.f32.mrb[0].mxu0
        %v651 = vadd.f32 %v556, %v650
        %v652 = vpop.f32.mrb[0].mxu0
        %653 = vdwg.mxu0
        %v654 = vand.u32 %v231, 4294901760
        %v655 = vsub.f32 %v231, %v654
        %v656 = vand.u32 %v655, 4294901760
        %657 = vmatprep.subr.mxu0 %v656
        %v658 = vand.u32 %v230, 4294901760
        %v659 = vsub.f32 %v230, %v658
        %v660 = vand.u32 %v659, 4294901760
        %661 = vmatpush1.xpose.msra.mxu0 %v660
        %v662 = vand.u32 %v233, 4294901760
        %v663 = vsub.f32 %v233, %v662
        %v664 = vand.u32 %v663, 4294901760
        %665 = vmatprep.subr.mxu0 %v664
        %v666 = vand.u32 %v232, 4294901760
        %v667 = vsub.f32 %v232, %v666
        %v668 = vand.u32 %v667, 4294901760
        %669 = vmatpush1.xpose.msra.mxu0 %v668
        %v670 = vand.u32 %v235, 4294901760
        %v671 = vsub.f32 %v235, %v670
        %v672 = vand.u32 %v671, 4294901760
        %673 = vmatprep.subr.mxu0 %v672
        %v674 = vand.u32 %v234, 4294901760
        %v675 = vsub.f32 %v234, %v674
        %v676 = vand.u32 %v675, 4294901760
        %677 = vmatpush1.xpose.msra.mxu0 %v676
        %v678 = vand.u32 %v237, 4294901760
        %v679 = vsub.f32 %v237, %v678
        %v680 = vand.u32 %v679, 4294901760
        %681 = vmatprep.subr.mxu0 %v680
        %v682 = vand.u32 %v236, 4294901760
        %v683 = vsub.f32 %v236, %v682
        %v684 = vand.u32 %v683, 4294901760
        %685 = vmatpush1.xpose.msra.mxu0 %v684
        %686 = vmatprep.subr.mxu0 0.0
        %687 = vmatpush1.xpose.msra.mxu0 0.0
        %688 = vmatprep.subr.mxu0 0.0
        %689 = vmatpush1.xpose.msra.mxu0 0.0
        %690 = vmatprep.subr.mxu0 0.0
        %691 = vmatpush1.xpose.msra.mxu0 0.0
        %692 = vmatprep.subr.mxu0 0.0
        %693 = vmatpush1.xpose.msra.mxu0 0.0
        %694 = vmatprep.subr.mxu0 0.0
        %695 = vmatpush1.xpose.msra.mxu0 0.0
        %696 = vmatprep.subr.mxu0 0.0
        %697 = vmatpush1.xpose.msra.mxu0 0.0
        %698 = vmatprep.subr.mxu0 0.0
        %699 = vmatpush1.xpose.msra.mxu0 0.0
        %700 = vmatprep.subr.mxu0 0.0
        %701 = vmatpush1.xpose.msra.mxu0 0.0
        %702 = vmatprep.subr.mxu0 0.0
        %703 = vmatpush1.xpose.msra.mxu0 0.0
        %704 = vmatprep.subr.mxu0 0.0
        %705 = vmatpush1.xpose.msra.mxu0 0.0
        %706 = vmatprep.subr.mxu0 0.0
        %707 = vmatpush1.xpose.msra.mxu0 0.0
        %708 = vmatprep.subr.mxu0 0.0
        %709 = vmatpush1.xpose.msra.mxu0 0.0
        %710 = vmatprep.subr.mxu0 0.0
        %711 = vmatpush1.xpose.msra.mxu0 0.0
        %712 = vmatprep.subr.mxu0 0.0
        %713 = vmatpush1.xpose.msra.mxu0 0.0
        %714 = vmatprep.subr.mxu0 0.0
        %715 = vmatpush1.xpose.msra.mxu0 0.0
        %716 = vmatprep.subr.mxu0 0.0
        %717 = vmatpush1.xpose.msra.mxu0 0.0
        %718 = vmatprep.subr.mxu0 0.0
        %719 = vmatpush1.xpose.msra.mxu0 0.0
        %720 = vmatprep.subr.mxu0 0.0
        %721 = vmatpush1.xpose.msra.mxu0 0.0
        %722 = vmatprep.subr.mxu0 0.0
        %723 = vmatpush1.xpose.msra.mxu0 0.0
        %724 = vmatprep.subr.mxu0 0.0
        %725 = vmatpush1.xpose.msra.mxu0 0.0
        %726 = vmatprep.subr.mxu0 0.0
        %727 = vmatpush1.xpose.msra.mxu0 0.0
        %728 = vmatprep.subr.mxu0 0.0
        %729 = vmatpush1.xpose.msra.mxu0 0.0
        %730 = vmatprep.subr.mxu0 0.0
        %731 = vmatpush1.xpose.msra.mxu0 0.0
        %732 = vmatprep.subr.mxu0 0.0
        %733 = vmatpush1.xpose.msra.mxu0 0.0
        %734 = vmatprep.subr.mxu0 0.0
        %735 = vmatpush1.xpose.msra.mxu0 0.0
        %736 = vmatprep.subr.mxu0 0.0
        %737 = vmatpush1.xpose.msra.mxu0 0.0
        %738 = vmatprep.subr.mxu0 0.0
        %739 = vmatpush1.xpose.msra.mxu0 0.0
        %740 = vmatprep.subr.mxu0 0.0
        %741 = vmatpush1.xpose.msra.mxu0 0.0
        %v742 = vand.u32 %v227, 4294901760
        %743 = vmatprep.mubr.f32.mxu0 %v742
        %v744 = vand.u32 %v226, 4294901760
        %745 = vmatmul.mubr.f32.gmra.mrb[0].mxu0 %v744
        %v746 = vpop.f32.mrb[0].mxu0
        %v747 = vadd.f32 %v640, %v746
        %v748 = vpop.f32.mrb[0].mxu0
        %v749 = vand.u32 %v229, 4294901760
        %750 = vmatprep.mubr.f32.mxu0 %v749
        %v751 = vand.u32 %v228, 4294901760
        %752 = vmatmul.mubr.f32.gmra.mrb[0].mxu0 %v751
        %v753 = vpop.f32.mrb[0].mxu0
        %v754 = vadd.f32 %v651, %v753
        %v755 = vpop.f32.mrb[0].mxu0
        %756 = vdwg.mxu0
        %v757 = vand.u32 %v231, 4294901760
        %758 = vmatprep.subr.mxu0 %v757
        %v759 = vand.u32 %v230, 4294901760
        %760 = vmatpush1.xpose.msra.mxu0 %v759
        %v761 = vand.u32 %v233, 4294901760
        %762 = vmatprep.subr.mxu0 %v761
        %v763 = vand.u32 %v232, 4294901760
        %764 = vmatpush1.xpose.msra.mxu0 %v763
        %v765 = vand.u32 %v235, 4294901760
        %766 = vmatprep.subr.mxu0 %v765
        %v767 = vand.u32 %v234, 4294901760
        %768 = vmatpush1.xpose.msra.mxu0 %v767
        %v769 = vand.u32 %v237, 4294901760
        %770 = vmatprep.subr.mxu0 %v769
        %v771 = vand.u32 %v236, 4294901760
        %772 = vmatpush1.xpose.msra.mxu0 %v771
        %773 = vmatprep.subr.mxu0 0.0
        %774 = vmatpush1.xpose.msra.mxu0 0.0
        %775 = vmatprep.subr.mxu0 0.0
        %776 = vmatpush1.xpose.msra.mxu0 0.0
        %777 = vmatprep.subr.mxu0 0.0
        %778 = vmatpush1.xpose.msra.mxu0 0.0
        %779 = vmatprep.subr.mxu0 0.0
        %780 = vmatpush1.xpose.msra.mxu0 0.0
        %781 = vmatprep.subr.mxu0 0.0
        %782 = vmatpush1.xpose.msra.mxu0 0.0
        %783 = vmatprep.subr.mxu0 0.0
        %784 = vmatpush1.xpose.msra.mxu0 0.0
        %785 = vmatprep.subr.mxu0 0.0
        %786 = vmatpush1.xpose.msra.mxu0 0.0
        %787 = vmatprep.subr.mxu0 0.0
        %788 = vmatpush1.xpose.msra.mxu0 0.0
        %789 = vmatprep.subr.mxu0 0.0
        %790 = vmatpush1.xpose.msra.mxu0 0.0
        %791 = vmatprep.subr.mxu0 0.0
        %792 = vmatpush1.xpose.msra.mxu0 0.0
        %793 = vmatprep.subr.mxu0 0.0
        %794 = vmatpush1.xpose.msra.mxu0 0.0
        %795 = vmatprep.subr.mxu0 0.0
        %796 = vmatpush1.xpose.msra.mxu0 0.0
        %797 = vmatprep.subr.mxu0 0.0
        %798 = vmatpush1.xpose.msra.mxu0 0.0
        %799 = vmatprep.subr.mxu0 0.0
        %800 = vmatpush1.xpose.msra.mxu0 0.0
        %801 = vmatprep.subr.mxu0 0.0
        %802 = vmatpush1.xpose.msra.mxu0 0.0
        %803 = vmatprep.subr.mxu0 0.0
        %804 = vmatpush1.xpose.msra.mxu0 0.0
        %805 = vmatprep.subr.mxu0 0.0
        %806 = vmatpush1.xpose.msra.mxu0 0.0
        %807 = vmatprep.subr.mxu0 0.0
        %808 = vmatpush1.xpose.msra.mxu0 0.0
        %809 = vmatprep.subr.mxu0 0.0
        %810 = vmatpush1.xpose.msra.mxu0 0.0
        %811 = vmatprep.subr.mxu0 0.0
        %812 = vmatpush1.xpose.msra.mxu0 0.0
        %813 = vmatprep.subr.mxu0 0.0
        %814 = vmatpush1.xpose.msra.mxu0 0.0
        %815 = vmatprep.subr.mxu0 0.0
        %816 = vmatpush1.xpose.msra.mxu0 0.0
        %817 = vmatprep.subr.mxu0 0.0
        %818 = vmatpush1.xpose.msra.mxu0 0.0
        %819 = vmatprep.subr.mxu0 0.0
        %820 = vmatpush1.xpose.msra.mxu0 0.0
        %821 = vmatprep.subr.mxu0 0.0
        %822 = vmatpush1.xpose.msra.mxu0 0.0
        %823 = vmatprep.subr.mxu0 0.0
        %824 = vmatpush1.xpose.msra.mxu0 0.0
        %825 = vmatprep.subr.mxu0 0.0
        %826 = vmatpush1.xpose.msra.mxu0 0.0
        %827 = vmatprep.subr.mxu0 0.0
        %828 = vmatpush1.xpose.msra.mxu0 0.0
        %v829 = vand.u32 %v227, 4294901760
        %830 = vmatprep.mubr.f32.mxu0 %v829
        %v831 = vand.u32 %v226, 4294901760
        %832 = vmatmul.mubr.f32.gmra.mrb[0].mxu0 %v831
        %v833 = vpop.f32.mrb[0].mxu0
        %v834 = vadd.f32 %v747, %v833
        %v835 = vpop.f32.mrb[0].mxu0
        %v836 = vand.u32 %v229, 4294901760
        %837 = vmatprep.mubr.f32.mxu0 %v836
        %v838 = vand.u32 %v228, 4294901760
        %839 = vmatmul.mubr.f32.gmra.mrb[0].mxu0 %v838
        %v840 = vpop.f32.mrb[0].mxu0
        %v841 = vadd.f32 %v754, %v840
        %v842 = vpop.f32.mrb[0].mxu0
        %843 = vdwg.mxu0
        %v844 = vld [vmem:[%s214] sm:$0xff]
        %v845 = vld [vmem:[%s214 + $0x8] sm:$0xff]
        %v846 = vadd.f32 %v844, %v834
        %v847 = vadd.f32 %v845, %v841
        %vm848 = vcmask 211968
        %849 = vst.msk [vmem:[%s214] sm:$0xff] %vm848, %v846
        %850 = vst.msk [vmem:[%s214 + $0x8] sm:$0xff] %vm848, %v847
        %s851 = sand.u32 %s105, 1
        %s852 = scalar_lea.sflag [#allocation4], %s851
        %s853 = sand.u32 %s105, 1
        %s854 = smul.addr %s853, 16
        %s855 = scalar_lea.vmem [#allocation7], %s854
        // Predicated region
        $region41: #{mlca_forward.4} parent=27 // pred_check
          %p856 = pneg %p115
        $region42: #{mlca_forward.4} parent=27 // pred_check_branch
          %858 = sbr.rel (%p856) target = $region44
        $region43: #{mlca_forward.4} parent=27 // pred_region
          %s859 = smul.u32 2, %s26
          %s861 = ssub.s32 256, 256
          %862 = vsyncadd %s852, %s861
          %s863 = smul.addr %s25, 2
          %s864 = sadd.s32 %s859, %s863
          %s865 = smul.addr %s864, 128
          %s866 = scalar_lea.hbm %s2, %s865
          %s867 = sshll.u32 %s855, 4
          %s868 = int_to_ptr.vmem [resolvable:$true] %s867
          %873 = dma.vmem_to_hbm [thread:$0]  %s868, 256, %s866, %s852, 128, 128, 8
        $region44: #{mlca_forward.4} parent=27 // pred_fallthru
          _
      $region28: #{mlca_forward.4} parent=5 // pred_fallthru
        _
      %p874 = scmp.le.s32.totalorder 2, %s15
      // Predicated region
      $region45: #{mlca_forward.4} parent=5 // pred_check
        %p875 = pneg %p874
      $region46: #{mlca_forward.4} parent=5 // pred_check_branch
        %877 = sbr.rel (%p875) target = $region48
      $region47: #{mlca_forward.4} parent=5 // pred_region
        %s878 = ssub.s32 %s15, 2
        // Predicated region
        $region49: #{mlca_forward.4} parent=47 // pred_check
          %p879 = pneg %p121
        $region50: #{mlca_forward.4} parent=47 // pred_check_branch
          %881 = sbr.rel (%p879) target = $region52
        $region51: #{mlca_forward.4} parent=47 // pred_region
          %s882 = sand.u32 %s106, 1
          %s883 = scalar_lea.sflag [#allocation4], %s882
          %s884 = sand.u32 %s106, 1
          %s885 = smul.addr %s884, 16
          %s886 = scalar_lea.vmem [#allocation7], %s885
          %887 = dma.done %s883, 256
        $region52: #{mlca_forward.4} parent=47 // pred_fallthru
          _
      $region48: #{mlca_forward.4} parent=5 // pred_fallthru
        _
    $region6: #{mlca_forward.4} parent=1 // loop_footer
      %s19 = sadd.s32 1, %s15
    $region7: #{mlca_forward.4} parent=1 // loop_footer_branch
      %14 = sbr.rel target = $region3
    $region8: #{mlca_forward.4} parent=1 // loop_exit
      _
    %888 = vsyncpa [#allocation3], 1
    %s889 = scalar_lea.sflag [#allocation3], 1
    %890 = vsyncpa %s889, 1
    %891 = vsyncpa [#allocation6], 1
    %892 = vsyncpa [#allocation4], 1
    %s893 = scalar_lea.sflag [#allocation4], 1
    %894 = vsyncpa %s893, 1

// kernel: mlca_forward.5
$region0: #{mlca_forward.5}
  #allocation0 [shape = 'u32[]', space=smem, size = 0x4, offset = 0x4, fixed_abs, tag = 'smem constant byte address 0x4 - core index']
  #allocation1 [shape = 'u32[144,128]{1,0:T(1,128)}', space=vmem, size = 0x12000, scoped, tag = 'internal scratch']
  %s0 = inlined_call_operand.vmem [shape: f32[3], index: 0, kind: input, shape index: {}]
  %s1 = inlined_call_operand.vmem [shape: f32[2,402], index: 1, kind: input, shape index: {}]
  %s2 = inlined_call_operand.vmem [shape: f32[2,400], index: 2, kind: output, shape index: {}]
  %s3 = sld [smem:[#allocation0]]
  $region22: #{mlca_forward.5} parent=0
    _
  %s5 = ssub.s32 1, %s3
  %s6 = scalar_select 0, %s5, %s3
  $region1: #{mlca_forward.5} parent=0
    #allocation2 [shape = 'u8[512]{0}', space=smem, size = 0x200, scoped, tag = 'input window, operand 0, single buffered']
    #allocation3 [shape = 's32[1]{0}', space=sflag, size = 0x4, scoped, tag = 'scoped memory for mlca_forward.5']
    %7 = vsyncpa [#allocation3], 0
    // Predicated region
    $region2: #{mlca_forward.5} parent=1 // pred_check
      _
    $region3: #{mlca_forward.5} parent=1 // pred_check_branch
      %9 = sbr.rel (0) target = $region5
    $region4: #{mlca_forward.5} parent=1 // pred_region
      %s11 = ssub.s32 16, 16
      %12 = vsyncadd [#allocation3], %s11
      %s14 = sshll.u32 %s0, 4
      %s15 = int_to_ptr.vmem [resolvable:$true] %s14
      %17 = dma.vmem_to_smem %s15, 16, [#allocation2], [#allocation3]
    $region5: #{mlca_forward.5} parent=1 // pred_fallthru
      _
    // Predicated region
    $region6: #{mlca_forward.5} parent=1 // pred_check
      _
    $region7: #{mlca_forward.5} parent=1 // pred_check_branch
      %19 = sbr.rel (0) target = $region9
    $region8: #{mlca_forward.5} parent=1 // pred_region
      _
    $region9: #{mlca_forward.5} parent=1 // pred_fallthru
      _
    // Predicated region
    $region10: #{mlca_forward.5} parent=1 // pred_check
      _
    $region11: #{mlca_forward.5} parent=1 // pred_check_branch
      %21 = sbr.rel (0) target = $region13
    $region12: #{mlca_forward.5} parent=1 // pred_region
      %22 = dma.done [#allocation3], 16
    $region13: #{mlca_forward.5} parent=1 // pred_fallthru
      _
    %23 = sfence
    %s24 = sld [smem:[#allocation2]]
    %v25 = vld [vmem:[%s1] sm:$0xff]
    %v26 = vstv %s24
    %v27 = vmul.f32 %v26, %v25
    %s28 = sld [smem:[#allocation2 + $0x1]]
    %v29 = vstv %s28
    %v30 = vmul.f32 %v29, %v25
    %32 = vrot.lane.b32.xlu0 %v30, 127
    %v33 = vpop.permute.xlu0 %32
    %v34 = vrot.slane %v33, 2
    %vm35 = vcmask 1039360
    %v36 = vsel %vm35, %v33, %v34
    %v38 = vadd.f32 %v27, %v36
    %s39 = sld [smem:[#allocation2 + $0x2]]
    %v40 = vstv %s39
    %v41 = vmul.f32 %v40, %v25
    %43 = vrot.lane.b32.xlu0 %v41, 126
    %v44 = vpop.permute.xlu0 %43
    %v45 = vrot.slane %v44, 2
    %vm46 = vcmask 1031168
    %v47 = vsel %vm46, %v44, %v45
    %v49 = vadd.f32 %v38, %v47
    %vm50 = vcmask 1041408
    %vm51 = vcmask 1043458
    %vm52 = vmor %vm51, %vm50
    %vm53 = vcmask 1045508
    %vm54 = vmor %vm53, %vm52
    %vm55 = vcmask 130054
    %vm56 = vmor %vm55, %vm54
    %57 = vst.msk [vmem:[%s2] sm:$0xff] %vm56, %v49
    // Predicated region
    $region14: #{mlca_forward.5} parent=1 // pred_check
      _
    $region15: #{mlca_forward.5} parent=1 // pred_check_branch
      %59 = sbr.rel (0) target = $region17
    $region16: #{mlca_forward.5} parent=1 // pred_region
      _
    $region17: #{mlca_forward.5} parent=1 // pred_fallthru
      _
    // Predicated region
    $region18: #{mlca_forward.5} parent=1 // pred_check
      _
    $region19: #{mlca_forward.5} parent=1 // pred_check_branch
      %61 = sbr.rel (0) target = $region21
    $region20: #{mlca_forward.5} parent=1 // pred_region
      _
    $region21: #{mlca_forward.5} parent=1 // pred_fallthru
      _
    %62 = vsyncpa [#allocation3], 1

// kernel: mlca_forward.7
$region0: #{mlca_forward.7}
  #allocation0 [shape = 'u32[]', space=smem, size = 0x4, offset = 0x4, fixed_abs, tag = 'smem constant byte address 0x4 - core index']
  #allocation1 [shape = 'u32[144,128]{1,0:T(1,128)}', space=vmem, size = 0x12000, scoped, tag = 'internal scratch']
  %s0 = inlined_call_operand.hbm [shape: f32[2,16,256], index: 0, kind: input, shape index: {}]
  %s1 = inlined_call_operand.hbm [shape: f32[2,16,25], index: 1, kind: input, shape index: {}]
  %s2 = inlined_call_operand.hbm [shape: f32[25,256], index: 2, kind: input, shape index: {}]
  %s3 = inlined_call_operand.hbm [shape: f32[2,16,256], index: 3, kind: output, shape index: {}]
  %s4 = sld [smem:[#allocation0]]
  $region57: #{mlca_forward.7} parent=0
    _
  %s6 = ssub.s32 1, %s4
  %s7 = scalar_select 0, %s6, %s4
  $region1: #{mlca_forward.7} parent=0
    #allocation2 [shape = 'u8[32768]{0}', space=vmem, size = 0x8000, scoped, tag = 'input window, operand 0']
    #allocation3 [shape = 's32[2]{0}', space=sflag, size = 0x8, scoped, tag = 'scoped memory for mlca_forward.7']
    #allocation4 [shape = 's32[2]{0}', space=sflag, size = 0x8, scoped, tag = 'scoped memory for mlca_forward.7']
    #allocation5 [shape = 'u8[16384]{0}', space=vmem, size = 0x4000, scoped, tag = 'input window, operand 1']
    #allocation6 [shape = 's32[2]{0}', space=sflag, size = 0x8, scoped, tag = 'scoped memory for mlca_forward.7']
    #allocation7 [shape = 'u8[32768]{0}', space=vmem, size = 0x8000, scoped, tag = 'input window, operand 2, single buffered']
    #allocation8 [shape = 'u8[32768]{0}', space=vmem, size = 0x8000, scoped, tag = 'output window, operand 0']
    %8 = vsyncpa [#allocation3], 0
    %s9 = scalar_lea.sflag [#allocation3], 1
    %10 = vsyncpa %s9, 0
    %11 = vsyncpa [#allocation6], 0
    %s12 = scalar_lea.sflag [#allocation6], 1
    %13 = vsyncpa %s12, 0
    %14 = vsyncpa [#allocation4], 0
    %s15 = scalar_lea.sflag [#allocation4], 1
    %16 = vsyncpa %s15, 0
    loop: start=0, step=1, limit=4
    $region2: #{mlca_forward.7} parent=1 // loop_pre_header
      _
    $region3: #{mlca_forward.7} parent=1 // loop_header
      %s18 = sphi 0, %s22
      %p19 = scmp.ge.s32.totalorder %s18, 4
      %s25 = sphi 0, %s44
      %s26 = sphi 0, %s40
      %s27 = sphi 0, %s36
      %s28 = sphi 0, %s25
      %s29 = sphi 0, %s26
      %s30 = sphi 0, %s27
      %s31 = sphi 0, %s28
      %s32 = sphi 0, %s29
      %s33 = sphi 0, %s30
      %s51 = sphi 0, %s53
      %s54 = sphi 0, %s51
      %s55 = sphi 0, %s54
      %s71 = sphi 0, %s55
      %s79 = sphi 0, %s81
      %s82 = sphi 0, %s79
      %s83 = sphi 0, %s82
      %s99 = sphi 0, %s83
      %s105 = sphi 0, %s107
      %s108 = sphi 0, %s105
      %s109 = sphi 0, %s108
      %s125 = sphi 0, %s109
      %s135 = sphi 0, %s137
      %s138 = sphi 0, %s135
      %s139 = sphi 0, %s138
      %s155 = sphi 0, %s139
    $region4: #{mlca_forward.7} parent=1 // loop_header_branch
      %21 = sbr.rel (%p19) target = $region8
    $region5: #{mlca_forward.7} parent=1 // loop_body
      %s23 = ssub.s32 %s18, 1
      %s24 = ssub.s32 %s18, 2
      %s34 = sadd.s32 1, %s27
      %p35 = scmp.ge.s32.totalorder %s34, 1
      %s36 = scalar_select %p35, 0, %s34
      %s37 = sadd.s32 1, %s26
      %s38 = scalar_select %p35, %s37, %s26
      %p39 = scmp.ge.s32.totalorder %s38, 1
      %s40 = scalar_select %p39, 0, %s38
      %s41 = sadd.s32 1, %s25
      %s42 = scalar_select %p39, %s41, %s25
      %p43 = scmp.ge.s32.totalorder %s42, 2
      %s44 = scalar_select %p43, 0, %s42
      %s45 = ssub.s32 %s25, %s44
      %s46 = ssub.s32 %s26, %s40
      %s47 = sor.u32 %s45, %s46
      %s48 = ssub.s32 %s27, %s36
      %s49 = sor.u32 %s47, %s48
      %p50 = scmp.eq.s32.totalorder %s49, 0
      %s52 = sadd.s32 %s51, 1
      %s53 = scalar_select %p50, %s51, %s52
      %p56 = pneg %p50
      %p57 = scmp.eq.s32.totalorder %s18, 1
      %p58 = por %p56, %p57
      %p59 = scmp.ne.s32.totalorder %s51, %s54
      %p60 = scmp.eq.s32.totalorder %s18, 0
      %p61 = por %p59, %p60
      %p62 = scmp.ne.s32.totalorder %s51, %s54
      %p63 = scmp.eq.s32.totalorder %s23, 1
      %p64 = por %p62, %p63
      %p65 = scmp.ne.s32.totalorder %s54, %s55
      %p66 = scmp.eq.s32.totalorder %s23, 0
      %p67 = por %p65, %p66
      %p68 = scmp.ne.s32.totalorder %s54, %s55
      %p69 = scmp.eq.s32.totalorder %s24, 1
      %p70 = por %p68, %p69
      %p72 = scmp.ne.s32.totalorder %s55, %s71
      %p73 = scmp.eq.s32.totalorder %s24, 0
      %p74 = por %p72, %p73
      %s75 = ssub.s32 %s25, %s44
      %s76 = ssub.s32 %s26, %s40
      %s77 = sor.u32 %s75, %s76
      %p78 = scmp.eq.s32.totalorder %s77, 0
      %s80 = sadd.s32 %s79, 1
      %s81 = scalar_select %p78, %s79, %s80
      %p84 = pneg %p78
      %p85 = scmp.eq.s32.totalorder %s18, 1
      %p86 = por %p84, %p85
      %p87 = scmp.ne.s32.totalorder %s79, %s82
      %p88 = scmp.eq.s32.totalorder %s18, 0
      %p89 = por %p87, %p88
      %p90 = scmp.ne.s32.totalorder %s79, %s82
      %p91 = scmp.eq.s32.totalorder %s23, 1
      %p92 = por %p90, %p91
      %p93 = scmp.ne.s32.totalorder %s82, %s83
      %p94 = scmp.eq.s32.totalorder %s23, 0
      %p95 = por %p93, %p94
      %p96 = scmp.ne.s32.totalorder %s82, %s83
      %p97 = scmp.eq.s32.totalorder %s24, 1
      %p98 = por %p96, %p97
      %p100 = scmp.ne.s32.totalorder %s83, %s99
      %p101 = scmp.eq.s32.totalorder %s24, 0
      %p102 = por %p100, %p101
      %s103 = ssub.s32 %s27, %s36
      %p104 = scmp.eq.s32.totalorder %s103, 0
      %s106 = sadd.s32 %s105, 1
      %s107 = scalar_select %p104, %s105, %s106
      %p110 = pneg %p104
      %p111 = scmp.eq.s32.totalorder %s18, 1
      %p112 = por %p110, %p111
      %p113 = scmp.ne.s32.totalorder %s105, %s108
      %p114 = scmp.eq.s32.totalorder %s18, 0
      %p115 = por %p113, %p114
      %p116 = scmp.ne.s32.totalorder %s105, %s108
      %p117 = scmp.eq.s32.totalorder %s23, 1
      %p118 = por %p116, %p117
      %p119 = scmp.ne.s32.totalorder %s108, %s109
      %p120 = scmp.eq.s32.totalorder %s23, 0
      %p121 = por %p119, %p120
      %p122 = scmp.ne.s32.totalorder %s108, %s109
      %p123 = scmp.eq.s32.totalorder %s24, 1
      %p124 = por %p122, %p123
      %p126 = scmp.ne.s32.totalorder %s109, %s125
      %p127 = scmp.eq.s32.totalorder %s24, 0
      %p128 = por %p126, %p127
      %s129 = ssub.s32 %s25, %s44
      %s130 = ssub.s32 %s26, %s40
      %s131 = sor.u32 %s129, %s130
      %s132 = ssub.s32 %s27, %s36
      %s133 = sor.u32 %s131, %s132
      %p134 = scmp.eq.s32.totalorder %s133, 0
      %s136 = sadd.s32 %s135, 1
      %s137 = scalar_select %p134, %s135, %s136
      %p140 = pneg %p134
      %p141 = scmp.eq.s32.totalorder %s18, 1
      %p142 = por %p140, %p141
      %p143 = scmp.ne.s32.totalorder %s135, %s138
      %p144 = scmp.eq.s32.totalorder %s18, 0
      %p145 = por %p143, %p144
      %p146 = scmp.ne.s32.totalorder %s135, %s138
      %p147 = scmp.eq.s32.totalorder %s23, 1
      %p148 = por %p146, %p147
      %p149 = scmp.ne.s32.totalorder %s138, %s139
      %p150 = scmp.eq.s32.totalorder %s23, 0
      %p151 = por %p149, %p150
      %p152 = scmp.ne.s32.totalorder %s138, %s139
      %p153 = scmp.eq.s32.totalorder %s24, 1
      %p154 = por %p152, %p153
      %p156 = scmp.ne.s32.totalorder %s139, %s155
      %p157 = scmp.eq.s32.totalorder %s24, 0
      %p158 = por %p156, %p157
      %p159 = scmp.le.s32.totalorder 1, %s18
      %p160 = scmp.lt.s32.totalorder %s18, 3
      %p161 = pnand %p159, %p160
      %p162 = pneg %p161
      // Predicated region
      $region9: #{mlca_forward.7} parent=5 // pred_check
        _
      $region10: #{mlca_forward.7} parent=5 // pred_check_branch
        %164 = sbr.rel (%p161) target = $region12
      $region11: #{mlca_forward.7} parent=5 // pred_region
        %s165 = ssub.s32 %s18, 1
        // Predicated region
        $region13: #{mlca_forward.7} parent=11 // pred_check
          %p166 = pneg %p121
        $region14: #{mlca_forward.7} parent=11 // pred_check_branch
          %168 = sbr.rel (%p166) target = $region16
        $region15: #{mlca_forward.7} parent=11 // pred_region
          %s169 = smul.u32 2, %s30
          %s171 = ssub.s32 1024, 1024
          %172 = vsyncadd [#allocation6], %s171
          %s173 = smul.addr %s169, 128
          %s174 = scalar_lea.hbm %s2, %s173
          %s175 = sshll.u32 [#allocation7], 4
          %s176 = int_to_ptr.vmem [resolvable:$true] %s175
          %181 = dma.hbm_to_vmem [thread:$0]  %s174, 1024, %s176, [#allocation6], 256, 256, 16
        $region16: #{mlca_forward.7} parent=11 // pred_fallthru
          _
      $region12: #{mlca_forward.7} parent=5 // pred_fallthru
        _
      %p182 = scmp.lt.s32.totalorder %s18, 2
      // Predicated region
      $region17: #{mlca_forward.7} parent=5 // pred_check
        %p183 = pneg %p182
      $region18: #{mlca_forward.7} parent=5 // pred_check_branch
        %185 = sbr.rel (%p183) target = $region20
      $region19: #{mlca_forward.7} parent=5 // pred_region
        // Predicated region
        $region21: #{mlca_forward.7} parent=19 // pred_check
          %p186 = pneg %p61
        $region22: #{mlca_forward.7} parent=19 // pred_check_branch
          %188 = sbr.rel (%p186) target = $region24
        $region23: #{mlca_forward.7} parent=19 // pred_region
          %s189 = sand.u32 %s51, 1
          %s190 = scalar_lea.sflag [#allocation3], %s189
          %s191 = sand.u32 %s51, 1
          %s192 = smul.addr %s191, 32
          %s193 = scalar_lea.vmem [#allocation2], %s192
          %s194 = smul.u32 2, %s26
          %s195 = smul.u32 2, %s27
          %s197 = ssub.s32 512, 512
          %198 = vsyncadd %s190, %s197
          %s199 = smul.addr %s194, 2
          %s200 = sadd.s32 %s195, %s199
          %s201 = smul.addr %s25, 4
          %s202 = sadd.s32 %s200, %s201
          %s203 = smul.addr %s202, 128
          %s204 = scalar_lea.hbm %s0, %s203
          %s205 = sshll.u32 %s193, 4
          %s206 = int_to_ptr.vmem [resolvable:$true] %s205
          %211 = dma.hbm_to_vmem [thread:$0]  %s204, 512, %s206, %s190, 256, 256, 16
        $region24: #{mlca_forward.7} parent=19 // pred_fallthru
          _
        // Predicated region
        $region25: #{mlca_forward.7} parent=19 // pred_check
          %p212 = pneg %p89
        $region26: #{mlca_forward.7} parent=19 // pred_check_branch
          %214 = sbr.rel (%p212) target = $region28
        $region27: #{mlca_forward.7} parent=19 // pred_region
          %s215 = sand.u32 %s18, 1
          %s216 = scalar_lea.sflag [#allocation6], %s215
          %s217 = sand.u32 %s79, 1
          %s218 = smul.addr %s217, 16
          %s219 = scalar_lea.vmem [#allocation5], %s218
          %s220 = smul.u32 2, %s26
          %s222 = ssub.s32 256, 256
          %223 = vsyncadd %s216, %s222
          %s224 = smul.addr %s25, 2
          %s225 = sadd.s32 %s220, %s224
          %s226 = smul.addr %s225, 128
          %s227 = scalar_lea.hbm %s1, %s226
          %s228 = sshll.u32 %s219, 4
          %s229 = int_to_ptr.vmem [resolvable:$true] %s228
          %234 = dma.hbm_to_vmem [thread:$0]  %s227, 256, %s229, %s216, 128, 128, 8
        $region28: #{mlca_forward.7} parent=19 // pred_fallthru
          _
      $region20: #{mlca_forward.7} parent=5 // pred_fallthru
        _
      %p235 = scmp.le.s32.totalorder 1, %s18
      %p236 = scmp.lt.s32.totalorder %s18, 3
      %p237 = pnand %p235, %p236
      %p238 = pneg %p237
      // Predicated region
      $region29: #{mlca_forward.7} parent=5 // pred_check
        _
      $region30: #{mlca_forward.7} parent=5 // pred_check_branch
        %240 = sbr.rel (%p237) target = $region32
      $region31: #{mlca_forward.7} parent=5 // pred_region
        %s241 = ssub.s32 %s18, 1
        %s242 = sand.u32 %s54, 1
        %s243 = scalar_lea.sflag [#allocation3], %s242
        %s244 = sand.u32 %s54, 1
        %s245 = smul.addr %s244, 32
        %s246 = scalar_lea.vmem [#allocation2], %s245
        // Predicated region
        $region33: #{mlca_forward.7} parent=31 // pred_check
          %p247 = pneg %p67
        $region34: #{mlca_forward.7} parent=31 // pred_check_branch
          %249 = sbr.rel (%p247) target = $region36
        $region35: #{mlca_forward.7} parent=31 // pred_region
          %250 = dma.done %s243, 512
        $region36: #{mlca_forward.7} parent=31 // pred_fallthru
          _
        %s251 = sand.u32 %s23, 1
        %s252 = scalar_lea.sflag [#allocation6], %s251
        %s253 = sand.u32 %s82, 1
        %s254 = smul.addr %s253, 16
        %s255 = scalar_lea.vmem [#allocation5], %s254
        // Predicated region
        $region37: #{mlca_forward.7} parent=31 // pred_check
          %p256 = pneg %p95
        $region38: #{mlca_forward.7} parent=31 // pred_check_branch
          %258 = sbr.rel (%p256) target = $region40
        $region39: #{mlca_forward.7} parent=31 // pred_region
          %259 = dma.done %s252, 256
        $region40: #{mlca_forward.7} parent=31 // pred_fallthru
          _
        // Predicated region
        $region41: #{mlca_forward.7} parent=31 // pred_check
          %p260 = pneg %p121
        $region42: #{mlca_forward.7} parent=31 // pred_check_branch
          %262 = sbr.rel (%p260) target = $region44
        $region43: #{mlca_forward.7} parent=31 // pred_region
          %263 = dma.done [#allocation6], 1024
        $region44: #{mlca_forward.7} parent=31 // pred_fallthru
          _
        %s264 = sand.u32 %s54, 1
        %s265 = scalar_lea.sflag [#allocation3], %s264
        %s266 = sand.u32 %s54, 1
        %s267 = smul.addr %s266, 32
        %s268 = scalar_lea.vmem [#allocation2], %s267
        %p269 = pneg %p67
        %p270 = pneg %p64
        %s271 = sand.u32 %s23, 1
        %s272 = scalar_lea.sflag [#allocation6], %s271
        %s273 = sand.u32 %s82, 1
        %s274 = smul.addr %s273, 16
        %s275 = scalar_lea.vmem [#allocation5], %s274
        %p276 = pneg %p95
        %p277 = pneg %p92
        %p278 = pneg %p121
        %p279 = pneg %p118
        %p280 = pneg %p151
        %p281 = pneg %p148
        %s282 = sand.u32 %s138, 1
        %s283 = scalar_lea.sflag [#allocation4], %s282
        %s284 = sand.u32 %s138, 1
        %s285 = smul.addr %s284, 32
        %s286 = scalar_lea.vmem [#allocation8], %s285
        %s287 = smul.u32 2, %s29
        %s288 = smul.u32 2, %s30
        %s289 = smul.u32 2, %s29
        %s290 = smul.u32 2, %s30
        %s291 = smul.u32 2, %s29
        %s292 = smul.u32 2, %s30
        %v293 = vld [vmem:[%s246] sm:$0xff]
        %v294 = vld [vmem:[%s246 + $0x8] sm:$0xff]
        %v295 = vld [vmem:[%s246 + $0x10] sm:$0xff]
        %v296 = vld [vmem:[%s246 + $0x18] sm:$0xff]
        %v297 = vld [vmem:[%s255] sm:$0xff]
        %v298 = vld [vmem:[%s255 + $0x8] sm:$0xff]
        %v299 = vld [vmem:[#allocation7] sm:$0xff]
        %v300 = vld [vmem:[#allocation7 + $0x8] sm:$0xff]
        %v301 = vld [vmem:[#allocation7 + $0x10] sm:$0xff]
        %v302 = vld [vmem:[#allocation7 + $0x18] sm:$0xff]
        %v303 = vld [vmem:[#allocation7 + $0x20] sm:$0xff]
        %v304 = vld [vmem:[#allocation7 + $0x28] sm:$0xff]
        %v305 = vld [vmem:[#allocation7 + $0x30] sm:$0x1]
        %v306 = vld [vmem:[#allocation7 + $0x38] sm:$0x1]
        %vm307 = vcmask 203776
        %v309 = vsel %vm307, %v297, 0
        %v312 = vsel %vm307, %v298, 0
        %vm314 = vcmask 1040384
        %v316 = vsel %vm314, %v305, 0
        %v319 = vsel %vm314, %v306, 0
        %v321 = vand.u32 %v300, 4294901760
        %322 = vmatprep.subr.mxu0 %v321
        %v323 = vand.u32 %v299, 4294901760
        %324 = vmatpush1.msra.mxu0 %v323
        %v325 = vand.u32 %v302, 4294901760
        %326 = vmatprep.subr.mxu0 %v325
        %v327 = vand.u32 %v301, 4294901760
        %328 = vmatpush1.msra.mxu0 %v327
        %v329 = vand.u32 %v304, 4294901760
        %330 = vmatprep.subr.mxu0 %v329
        %v331 = vand.u32 %v303, 4294901760
        %332 = vmatpush1.msra.mxu0 %v331
        %v333 = vand.u32 %v319, 4294901760
        %334 = vmatprep.subr.mxu0 %v333
        %v335 = vand.u32 %v316, 4294901760
        %336 = vmatpush1.msra.mxu0 %v335
        %337 = vmatprep.subr.mxu0 0.0
        %338 = vmatpush1.msra.mxu0 0.0
        %339 = vmatprep.subr.mxu0 0.0
        %340 = vmatpush1.msra.mxu0 0.0
        %341 = vmatprep.subr.mxu0 0.0
        %342 = vmatpush1.msra.mxu0 0.0
        %343 = vmatprep.subr.mxu0 0.0
        %344 = vmatpush1.msra.mxu0 0.0
        %345 = vmatprep.subr.mxu0 0.0
        %346 = vmatpush1.msra.mxu0 0.0
        %347 = vmatprep.subr.mxu0 0.0
        %348 = vmatpush1.msra.mxu0 0.0
        %349 = vmatprep.subr.mxu0 0.0
        %350 = vmatpush1.msra.mxu0 0.0
        %351 = vmatprep.subr.mxu0 0.0
        %352 = vmatpush1.msra.mxu0 0.0
        %353 = vmatprep.subr.mxu0 0.0
        %354 = vmatpush1.msra.mxu0 0.0
        %355 = vmatprep.subr.mxu0 0.0
        %356 = vmatpush1.msra.mxu0 0.0
        %357 = vmatprep.subr.mxu0 0.0
        %358 = vmatpush1.msra.mxu0 0.0
        %359 = vmatprep.subr.mxu0 0.0
        %360 = vmatpush1.msra.mxu0 0.0
        %361 = vmatprep.subr.mxu0 0.0
        %362 = vmatpush1.msra.mxu0 0.0
        %363 = vmatprep.subr.mxu0 0.0
        %364 = vmatpush1.msra.mxu0 0.0
        %365 = vmatprep.subr.mxu0 0.0
        %366 = vmatpush1.msra.mxu0 0.0
        %367 = vmatprep.subr.mxu0 0.0
        %368 = vmatpush1.msra.mxu0 0.0
        %369 = vmatprep.subr.mxu0 0.0
        %370 = vmatpush1.msra.mxu0 0.0
        %371 = vmatprep.subr.mxu0 0.0
        %372 = vmatpush1.msra.mxu0 0.0
        %373 = vmatprep.subr.mxu0 0.0
        %374 = vmatpush1.msra.mxu0 0.0
        %375 = vmatprep.subr.mxu0 0.0
        %376 = vmatpush1.msra.mxu0 0.0
        %377 = vmatprep.subr.mxu0 0.0
        %378 = vmatpush1.msra.mxu0 0.0
        %379 = vmatprep.subr.mxu0 0.0
        %380 = vmatpush1.msra.mxu0 0.0
        %381 = vmatprep.subr.mxu0 0.0
        %382 = vmatpush1.msra.mxu0 0.0
        %383 = vmatprep.subr.mxu0 0.0
        %384 = vmatpush1.msra.mxu0 0.0
        %385 = vmatprep.subr.mxu0 0.0
        %386 = vmatpush1.msra.mxu0 0.0
        %387 = vmatprep.subr.mxu0 0.0
        %388 = vmatpush1.msra.mxu0 0.0
        %389 = vmatprep.subr.mxu0 0.0
        %390 = vmatpush1.msra.mxu0 0.0
        %391 = vmatprep.subr.mxu0 0.0
        %392 = vmatpush1.msra.mxu0 0.0
        %393 = vmatprep.mubr.f32.mxu0 0.0
        %v394 = vand.u32 %v309, 4294901760
        %v395 = vsub.f32 %v309, %v394
        %v396 = vand.u32 %v395, 4294901760
        %v397 = vsub.f32 %v395, %v396
        %v398 = vand.u32 %v397, 4294901760
        %399 = vmatmul.mubr.f32.gmra.mrb[0].mxu0 %v398
        %v400 = vpop.f32.mrb[0].mxu0
        %v401 = vadd.f32 0.0, %v400
        %v402 = vpop.f32.mrb[0].mxu0
        %v403 = vadd.f32 0.0, %v402
        %404 = vmatprep.mubr.f32.mxu0 0.0
        %v405 = vand.u32 %v312, 4294901760
        %v406 = vsub.f32 %v312, %v405
        %v407 = vand.u32 %v406, 4294901760
        %v408 = vsub.f32 %v406, %v407
        %v409 = vand.u32 %v408, 4294901760
        %410 = vmatmul.mubr.f32.gmra.mrb[0].mxu0 %v409
        %v411 = vpop.f32.mrb[0].mxu0
        %v412 = vadd.f32 0.0, %v411
        %v413 = vpop.f32.mrb[0].mxu0
        %v414 = vadd.f32 0.0, %v413
        %415 = vdwg.mxu0
        %v416 = vand.u32 %v300, 4294901760
        %v417 = vsub.f32 %v300, %v416
        %v418 = vand.u32 %v417, 4294901760
        %v419 = vsub.f32 %v417, %v418
        %v420 = vand.u32 %v419, 4294901760
        %421 = vmatprep.subr.mxu0 %v420
        %v422 = vand.u32 %v299, 4294901760
        %v423 = vsub.f32 %v299, %v422
        %v424 = vand.u32 %v423, 4294901760
        %v425 = vsub.f32 %v423, %v424
        %v426 = vand.u32 %v425, 4294901760
        %427 = vmatpush1.msra.mxu0 %v426
        %v428 = vand.u32 %v302, 4294901760
        %v429 = vsub.f32 %v302, %v428
        %v430 = vand.u32 %v429, 4294901760
        %v431 = vsub.f32 %v429, %v430
        %v432 = vand.u32 %v431, 4294901760
        %433 = vmatprep.subr.mxu0 %v432
        %v434 = vand.u32 %v301, 4294901760
        %v435 = vsub.f32 %v301, %v434
        %v436 = vand.u32 %v435, 4294901760
        %v437 = vsub.f32 %v435, %v436
        %v438 = vand.u32 %v437, 4294901760
        %439 = vmatpush1.msra.mxu0 %v438
        %v440 = vand.u32 %v304, 4294901760
        %v441 = vsub.f32 %v304, %v440
        %v442 = vand.u32 %v441, 4294901760
        %v443 = vsub.f32 %v441, %v442
        %v444 = vand.u32 %v443, 4294901760
        %445 = vmatprep.subr.mxu0 %v444
        %v446 = vand.u32 %v303, 4294901760
        %v447 = vsub.f32 %v303, %v446
        %v448 = vand.u32 %v447, 4294901760
        %v449 = vsub.f32 %v447, %v448
        %v450 = vand.u32 %v449, 4294901760
        %451 = vmatpush1.msra.mxu0 %v450
        %v452 = vand.u32 %v319, 4294901760
        %v453 = vsub.f32 %v319, %v452
        %v454 = vand.u32 %v453, 4294901760
        %v455 = vsub.f32 %v453, %v454
        %v456 = vand.u32 %v455, 4294901760
        %457 = vmatprep.subr.mxu0 %v456
        %v458 = vand.u32 %v316, 4294901760
        %v459 = vsub.f32 %v316, %v458
        %v460 = vand.u32 %v459, 4294901760
        %v461 = vsub.f32 %v459, %v460
        %v462 = vand.u32 %v461, 4294901760
        %463 = vmatpush1.msra.mxu0 %v462
        %464 = vmatprep.subr.mxu0 0.0
        %465 = vmatpush1.msra.mxu0 0.0
        %466 = vmatprep.subr.mxu0 0.0
        %467 = vmatpush1.msra.mxu0 0.0
        %468 = vmatprep.subr.mxu0 0.0
        %469 = vmatpush1.msra.mxu0 0.0
        %470 = vmatprep.subr.mxu0 0.0
        %471 = vmatpush1.msra.mxu0 0.0
        %472 = vmatprep.subr.mxu0 0.0
        %473 = vmatpush1.msra.mxu0 0.0
        %474 = vmatprep.subr.mxu0 0.0
        %475 = vmatpush1.msra.mxu0 0.0
        %476 = vmatprep.subr.mxu0 0.0
        %477 = vmatpush1.msra.mxu0 0.0
        %478 = vmatprep.subr.mxu0 0.0
        %479 = vmatpush1.msra.mxu0 0.0
        %480 = vmatprep.subr.mxu0 0.0
        %481 = vmatpush1.msra.mxu0 0.0
        %482 = vmatprep.subr.mxu0 0.0
        %483 = vmatpush1.msra.mxu0 0.0
        %484 = vmatprep.subr.mxu0 0.0
        %485 = vmatpush1.msra.mxu0 0.0
        %486 = vmatprep.subr.mxu0 0.0
        %487 = vmatpush1.msra.mxu0 0.0
        %488 = vmatprep.subr.mxu0 0.0
        %489 = vmatpush1.msra.mxu0 0.0
        %490 = vmatprep.subr.mxu0 0.0
        %491 = vmatpush1.msra.mxu0 0.0
        %492 = vmatprep.subr.mxu0 0.0
        %493 = vmatpush1.msra.mxu0 0.0
        %494 = vmatprep.subr.mxu0 0.0
        %495 = vmatpush1.msra.mxu0 0.0
        %496 = vmatprep.subr.mxu0 0.0
        %497 = vmatpush1.msra.mxu0 0.0
        %498 = vmatprep.subr.mxu0 0.0
        %499 = vmatpush1.msra.mxu0 0.0
        %500 = vmatprep.subr.mxu0 0.0
        %501 = vmatpush1.msra.mxu0 0.0
        %502 = vmatprep.subr.mxu0 0.0
        %503 = vmatpush1.msra.mxu0 0.0
        %504 = vmatprep.subr.mxu0 0.0
        %505 = vmatpush1.msra.mxu0 0.0
        %506 = vmatprep.subr.mxu0 0.0
        %507 = vmatpush1.msra.mxu0 0.0
        %508 = vmatprep.subr.mxu0 0.0
        %509 = vmatpush1.msra.mxu0 0.0
        %510 = vmatprep.subr.mxu0 0.0
        %511 = vmatpush1.msra.mxu0 0.0
        %512 = vmatprep.subr.mxu0 0.0
        %513 = vmatpush1.msra.mxu0 0.0
        %514 = vmatprep.subr.mxu0 0.0
        %515 = vmatpush1.msra.mxu0 0.0
        %516 = vmatprep.subr.mxu0 0.0
        %517 = vmatpush1.msra.mxu0 0.0
        %518 = vmatprep.subr.mxu0 0.0
        %519 = vmatpush1.msra.mxu0 0.0
        %520 = vmatprep.mubr.f32.mxu0 0.0
        %v521 = vand.u32 %v309, 4294901760
        %522 = vmatmul.mubr.f32.gmra.mrb[0].mxu0 %v521
        %v523 = vpop.f32.mrb[0].mxu0
        %v524 = vadd.f32 %v401, %v523
        %v525 = vpop.f32.mrb[0].mxu0
        %v526 = vadd.f32 %v403, %v525
        %527 = vmatprep.mubr.f32.mxu0 0.0
        %v528 = vand.u32 %v312, 4294901760
        %529 = vmatmul.mubr.f32.gmra.mrb[0].mxu0 %v528
        %v530 = vpop.f32.mrb[0].mxu0
        %v531 = vadd.f32 %v412, %v530
        %v532 = vpop.f32.mrb[0].mxu0
        %v533 = vadd.f32 %v414, %v532
        %534 = vdwg.mxu0
        %v535 = vand.u32 %v300, 4294901760
        %v536 = vsub.f32 %v300, %v535
        %537 = vmatprep.subr.mxu0 %v536
        %v538 = vand.u32 %v299, 4294901760
        %v539 = vsub.f32 %v299, %v538
        %540 = vmatpush1.msra.mxu0 %v539
        %v541 = vand.u32 %v302, 4294901760
        %v542 = vsub.f32 %v302, %v541
        %543 = vmatprep.subr.mxu0 %v542
        %v544 = vand.u32 %v301, 4294901760
        %v545 = vsub.f32 %v301, %v544
        %546 = vmatpush1.msra.mxu0 %v545
        %v547 = vand.u32 %v304, 4294901760
        %v548 = vsub.f32 %v304, %v547
        %549 = vmatprep.subr.mxu0 %v548
        %v550 = vand.u32 %v303, 4294901760
        %v551 = vsub.f32 %v303, %v550
        %552 = vmatpush1.msra.mxu0 %v551
        %v553 = vand.u32 %v319, 4294901760
        %v554 = vsub.f32 %v319, %v553
        %555 = vmatprep.subr.mxu0 %v554
        %v556 = vand.u32 %v316, 4294901760
        %v557 = vsub.f32 %v316, %v556
        %558 = vmatpush1.msra.mxu0 %v557
        %559 = vmatprep.subr.mxu0 0.0
        %560 = vmatpush1.msra.mxu0 0.0
        %561 = vmatprep.subr.mxu0 0.0
        %562 = vmatpush1.msra.mxu0 0.0
        %563 = vmatprep.subr.mxu0 0.0
        %564 = vmatpush1.msra.mxu0 0.0
        %565 = vmatprep.subr.mxu0 0.0
        %566 = vmatpush1.msra.mxu0 0.0
        %567 = vmatprep.subr.mxu0 0.0
        %568 = vmatpush1.msra.mxu0 0.0
        %569 = vmatprep.subr.mxu0 0.0
        %570 = vmatpush1.msra.mxu0 0.0
        %571 = vmatprep.subr.mxu0 0.0
        %572 = vmatpush1.msra.mxu0 0.0
        %573 = vmatprep.subr.mxu0 0.0
        %574 = vmatpush1.msra.mxu0 0.0
        %575 = vmatprep.subr.mxu0 0.0
        %576 = vmatpush1.msra.mxu0 0.0
        %577 = vmatprep.subr.mxu0 0.0
        %578 = vmatpush1.msra.mxu0 0.0
        %579 = vmatprep.subr.mxu0 0.0
        %580 = vmatpush1.msra.mxu0 0.0
        %581 = vmatprep.subr.mxu0 0.0
        %582 = vmatpush1.msra.mxu0 0.0
        %583 = vmatprep.subr.mxu0 0.0
        %584 = vmatpush1.msra.mxu0 0.0
        %585 = vmatprep.subr.mxu0 0.0
        %586 = vmatpush1.msra.mxu0 0.0
        %587 = vmatprep.subr.mxu0 0.0
        %588 = vmatpush1.msra.mxu0 0.0
        %589 = vmatprep.subr.mxu0 0.0
        %590 = vmatpush1.msra.mxu0 0.0
        %591 = vmatprep.subr.mxu0 0.0
        %592 = vmatpush1.msra.mxu0 0.0
        %593 = vmatprep.subr.mxu0 0.0
        %594 = vmatpush1.msra.mxu0 0.0
        %595 = vmatprep.subr.mxu0 0.0
        %596 = vmatpush1.msra.mxu0 0.0
        %597 = vmatprep.subr.mxu0 0.0
        %598 = vmatpush1.msra.mxu0 0.0
        %599 = vmatprep.subr.mxu0 0.0
        %600 = vmatpush1.msra.mxu0 0.0
        %601 = vmatprep.subr.mxu0 0.0
        %602 = vmatpush1.msra.mxu0 0.0
        %603 = vmatprep.subr.mxu0 0.0
        %604 = vmatpush1.msra.mxu0 0.0
        %605 = vmatprep.subr.mxu0 0.0
        %606 = vmatpush1.msra.mxu0 0.0
        %607 = vmatprep.subr.mxu0 0.0
        %608 = vmatpush1.msra.mxu0 0.0
        %609 = vmatprep.subr.mxu0 0.0
        %610 = vmatpush1.msra.mxu0 0.0
        %611 = vmatprep.subr.mxu0 0.0
        %612 = vmatpush1.msra.mxu0 0.0
        %613 = vmatprep.subr.mxu0 0.0
        %614 = vmatpush1.msra.mxu0 0.0
        %615 = vmatprep.mubr.f32.mxu0 0.0
        %v616 = vand.u32 %v309, 4294901760
        %v617 = vsub.f32 %v309, %v616
        %618 = vmatmul.mubr.f32.gmra.mrb[0].mxu0 %v617
        %v619 = vpop.f32.mrb[0].mxu0
        %v620 = vadd.f32 %v524, %v619
        %v621 = vpop.f32.mrb[0].mxu0
        %v622 = vadd.f32 %v526, %v621
        %623 = vmatprep.mubr.f32.mxu0 0.0
        %v624 = vand.u32 %v312, 4294901760
        %v625 = vsub.f32 %v312, %v624
        %626 = vmatmul.mubr.f32.gmra.mrb[0].mxu0 %v625
        %v627 = vpop.f32.mrb[0].mxu0
        %v628 = vadd.f32 %v531, %v627
        %v629 = vpop.f32.mrb[0].mxu0
        %v630 = vadd.f32 %v533, %v629
        %631 = vdwg.mxu0
        %v632 = vand.u32 %v300, 4294901760
        %633 = vmatprep.subr.mxu0 %v632
        %v634 = vand.u32 %v299, 4294901760
        %635 = vmatpush1.msra.mxu0 %v634
        %v636 = vand.u32 %v302, 4294901760
        %637 = vmatprep.subr.mxu0 %v636
        %v638 = vand.u32 %v301, 4294901760
        %639 = vmatpush1.msra.mxu0 %v638
        %v640 = vand.u32 %v304, 4294901760
        %641 = vmatprep.subr.mxu0 %v640
        %v642 = vand.u32 %v303, 4294901760
        %643 = vmatpush1.msra.mxu0 %v642
        %v644 = vand.u32 %v319, 4294901760
        %645 = vmatprep.subr.mxu0 %v644
        %v646 = vand.u32 %v316, 4294901760
        %647 = vmatpush1.msra.mxu0 %v646
        %648 = vmatprep.subr.mxu0 0.0
        %649 = vmatpush1.msra.mxu0 0.0
        %650 = vmatprep.subr.mxu0 0.0
        %651 = vmatpush1.msra.mxu0 0.0
        %652 = vmatprep.subr.mxu0 0.0
        %653 = vmatpush1.msra.mxu0 0.0
        %654 = vmatprep.subr.mxu0 0.0
        %655 = vmatpush1.msra.mxu0 0.0
        %656 = vmatprep.subr.mxu0 0.0
        %657 = vmatpush1.msra.mxu0 0.0
        %658 = vmatprep.subr.mxu0 0.0
        %659 = vmatpush1.msra.mxu0 0.0
        %660 = vmatprep.subr.mxu0 0.0
        %661 = vmatpush1.msra.mxu0 0.0
        %662 = vmatprep.subr.mxu0 0.0
        %663 = vmatpush1.msra.mxu0 0.0
        %664 = vmatprep.subr.mxu0 0.0
        %665 = vmatpush1.msra.mxu0 0.0
        %666 = vmatprep.subr.mxu0 0.0
        %667 = vmatpush1.msra.mxu0 0.0
        %668 = vmatprep.subr.mxu0 0.0
        %669 = vmatpush1.msra.mxu0 0.0
        %670 = vmatprep.subr.mxu0 0.0
        %671 = vmatpush1.msra.mxu0 0.0
        %672 = vmatprep.subr.mxu0 0.0
        %673 = vmatpush1.msra.mxu0 0.0
        %674 = vmatprep.subr.mxu0 0.0
        %675 = vmatpush1.msra.mxu0 0.0
        %676 = vmatprep.subr.mxu0 0.0
        %677 = vmatpush1.msra.mxu0 0.0
        %678 = vmatprep.subr.mxu0 0.0
        %679 = vmatpush1.msra.mxu0 0.0
        %680 = vmatprep.subr.mxu0 0.0
        %681 = vmatpush1.msra.mxu0 0.0
        %682 = vmatprep.subr.mxu0 0.0
        %683 = vmatpush1.msra.mxu0 0.0
        %684 = vmatprep.subr.mxu0 0.0
        %685 = vmatpush1.msra.mxu0 0.0
        %686 = vmatprep.subr.mxu0 0.0
        %687 = vmatpush1.msra.mxu0 0.0
        %688 = vmatprep.subr.mxu0 0.0
        %689 = vmatpush1.msra.mxu0 0.0
        %690 = vmatprep.subr.mxu0 0.0
        %691 = vmatpush1.msra.mxu0 0.0
        %692 = vmatprep.subr.mxu0 0.0
        %693 = vmatpush1.msra.mxu0 0.0
        %694 = vmatprep.subr.mxu0 0.0
        %695 = vmatpush1.msra.mxu0 0.0
        %696 = vmatprep.subr.mxu0 0.0
        %697 = vmatpush1.msra.mxu0 0.0
        %698 = vmatprep.subr.mxu0 0.0
        %699 = vmatpush1.msra.mxu0 0.0
        %700 = vmatprep.subr.mxu0 0.0
        %701 = vmatpush1.msra.mxu0 0.0
        %702 = vmatprep.subr.mxu0 0.0
        %703 = vmatpush1.msra.mxu0 0.0
        %704 = vmatprep.mubr.f32.mxu0 0.0
        %v705 = vand.u32 %v309, 4294901760
        %v706 = vsub.f32 %v309, %v705
        %v707 = vand.u32 %v706, 4294901760
        %708 = vmatmul.mubr.f32.gmra.mrb[0].mxu0 %v707
        %v709 = vpop.f32.mrb[0].mxu0
        %v710 = vadd.f32 %v620, %v709
        %v711 = vpop.f32.mrb[0].mxu0
        %v712 = vadd.f32 %v622, %v711
        %713 = vmatprep.mubr.f32.mxu0 0.0
        %v714 = vand.u32 %v312, 4294901760
        %v715 = vsub.f32 %v312, %v714
        %v716 = vand.u32 %v715, 4294901760
        %717 = vmatmul.mubr.f32.gmra.mrb[0].mxu0 %v716
        %v718 = vpop.f32.mrb[0].mxu0
        %v719 = vadd.f32 %v628, %v718
        %v720 = vpop.f32.mrb[0].mxu0
        %v721 = vadd.f32 %v630, %v720
        %722 = vdwg.mxu0
        %v723 = vand.u32 %v300, 4294901760
        %v724 = vsub.f32 %v300, %v723
        %v725 = vand.u32 %v724, 4294901760
        %726 = vmatprep.subr.mxu0 %v725
        %v727 = vand.u32 %v299, 4294901760
        %v728 = vsub.f32 %v299, %v727
        %v729 = vand.u32 %v728, 4294901760
        %730 = vmatpush1.msra.mxu0 %v729
        %v731 = vand.u32 %v302, 4294901760
        %v732 = vsub.f32 %v302, %v731
        %v733 = vand.u32 %v732, 4294901760
        %734 = vmatprep.subr.mxu0 %v733
        %v735 = vand.u32 %v301, 4294901760
        %v736 = vsub.f32 %v301, %v735
        %v737 = vand.u32 %v736, 4294901760
        %738 = vmatpush1.msra.mxu0 %v737
        %v739 = vand.u32 %v304, 4294901760
        %v740 = vsub.f32 %v304, %v739
        %v741 = vand.u32 %v740, 4294901760
        %742 = vmatprep.subr.mxu0 %v741
        %v743 = vand.u32 %v303, 4294901760
        %v744 = vsub.f32 %v303, %v743
        %v745 = vand.u32 %v744, 4294901760
        %746 = vmatpush1.msra.mxu0 %v745
        %v747 = vand.u32 %v319, 4294901760
        %v748 = vsub.f32 %v319, %v747
        %v749 = vand.u32 %v748, 4294901760
        %750 = vmatprep.subr.mxu0 %v749
        %v751 = vand.u32 %v316, 4294901760
        %v752 = vsub.f32 %v316, %v751
        %v753 = vand.u32 %v752, 4294901760
        %754 = vmatpush1.msra.mxu0 %v753
        %755 = vmatprep.subr.mxu0 0.0
        %756 = vmatpush1.msra.mxu0 0.0
        %757 = vmatprep.subr.mxu0 0.0
        %758 = vmatpush1.msra.mxu0 0.0
        %759 = vmatprep.subr.mxu0 0.0
        %760 = vmatpush1.msra.mxu0 0.0
        %761 = vmatprep.subr.mxu0 0.0
        %762 = vmatpush1.msra.mxu0 0.0
        %763 = vmatprep.subr.mxu0 0.0
        %764 = vmatpush1.msra.mxu0 0.0
        %765 = vmatprep.subr.mxu0 0.0
        %766 = vmatpush1.msra.mxu0 0.0
        %767 = vmatprep.subr.mxu0 0.0
        %768 = vmatpush1.msra.mxu0 0.0
        %769 = vmatprep.subr.mxu0 0.0
        %770 = vmatpush1.msra.mxu0 0.0
        %771 = vmatprep.subr.mxu0 0.0
        %772 = vmatpush1.msra.mxu0 0.0
        %773 = vmatprep.subr.mxu0 0.0
        %774 = vmatpush1.msra.mxu0 0.0
        %775 = vmatprep.subr.mxu0 0.0
        %776 = vmatpush1.msra.mxu0 0.0
        %777 = vmatprep.subr.mxu0 0.0
        %778 = vmatpush1.msra.mxu0 0.0
        %779 = vmatprep.subr.mxu0 0.0
        %780 = vmatpush1.msra.mxu0 0.0
        %781 = vmatprep.subr.mxu0 0.0
        %782 = vmatpush1.msra.mxu0 0.0
        %783 = vmatprep.subr.mxu0 0.0
        %784 = vmatpush1.msra.mxu0 0.0
        %785 = vmatprep.subr.mxu0 0.0
        %786 = vmatpush1.msra.mxu0 0.0
        %787 = vmatprep.subr.mxu0 0.0
        %788 = vmatpush1.msra.mxu0 0.0
        %789 = vmatprep.subr.mxu0 0.0
        %790 = vmatpush1.msra.mxu0 0.0
        %791 = vmatprep.subr.mxu0 0.0
        %792 = vmatpush1.msra.mxu0 0.0
        %793 = vmatprep.subr.mxu0 0.0
        %794 = vmatpush1.msra.mxu0 0.0
        %795 = vmatprep.subr.mxu0 0.0
        %796 = vmatpush1.msra.mxu0 0.0
        %797 = vmatprep.subr.mxu0 0.0
        %798 = vmatpush1.msra.mxu0 0.0
        %799 = vmatprep.subr.mxu0 0.0
        %800 = vmatpush1.msra.mxu0 0.0
        %801 = vmatprep.subr.mxu0 0.0
        %802 = vmatpush1.msra.mxu0 0.0
        %803 = vmatprep.subr.mxu0 0.0
        %804 = vmatpush1.msra.mxu0 0.0
        %805 = vmatprep.subr.mxu0 0.0
        %806 = vmatpush1.msra.mxu0 0.0
        %807 = vmatprep.subr.mxu0 0.0
        %808 = vmatpush1.msra.mxu0 0.0
        %809 = vmatprep.subr.mxu0 0.0
        %810 = vmatpush1.msra.mxu0 0.0
        %811 = vmatprep.mubr.f32.mxu0 0.0
        %v812 = vand.u32 %v309, 4294901760
        %813 = vmatmul.mubr.f32.gmra.mrb[0].mxu0 %v812
        %v814 = vpop.f32.mrb[0].mxu0
        %v815 = vadd.f32 %v710, %v814
        %v816 = vpop.f32.mrb[0].mxu0
        %v817 = vadd.f32 %v712, %v816
        %818 = vmatprep.mubr.f32.mxu0 0.0
        %v819 = vand.u32 %v312, 4294901760
        %820 = vmatmul.mubr.f32.gmra.mrb[0].mxu0 %v819
        %v821 = vpop.f32.mrb[0].mxu0
        %v822 = vadd.f32 %v719, %v821
        %v823 = vpop.f32.mrb[0].mxu0
        %v824 = vadd.f32 %v721, %v823
        %825 = vdwg.mxu0
        %v826 = vand.u32 %v300, 4294901760
        %827 = vmatprep.subr.mxu0 %v826
        %v828 = vand.u32 %v299, 4294901760
        %829 = vmatpush1.msra.mxu0 %v828
        %v830 = vand.u32 %v302, 4294901760
        %831 = vmatprep.subr.mxu0 %v830
        %v832 = vand.u32 %v301, 4294901760
        %833 = vmatpush1.msra.mxu0 %v832
        %v834 = vand.u32 %v304, 4294901760
        %835 = vmatprep.subr.mxu0 %v834
        %v836 = vand.u32 %v303, 4294901760
        %837 = vmatpush1.msra.mxu0 %v836
        %v838 = vand.u32 %v319, 4294901760
        %839 = vmatprep.subr.mxu0 %v838
        %v840 = vand.u32 %v316, 4294901760
        %841 = vmatpush1.msra.mxu0 %v840
        %842 = vmatprep.subr.mxu0 0.0
        %843 = vmatpush1.msra.mxu0 0.0
        %844 = vmatprep.subr.mxu0 0.0
        %845 = vmatpush1.msra.mxu0 0.0
        %846 = vmatprep.subr.mxu0 0.0
        %847 = vmatpush1.msra.mxu0 0.0
        %848 = vmatprep.subr.mxu0 0.0
        %849 = vmatpush1.msra.mxu0 0.0
        %850 = vmatprep.subr.mxu0 0.0
        %851 = vmatpush1.msra.mxu0 0.0
        %852 = vmatprep.subr.mxu0 0.0
        %853 = vmatpush1.msra.mxu0 0.0
        %854 = vmatprep.subr.mxu0 0.0
        %855 = vmatpush1.msra.mxu0 0.0
        %856 = vmatprep.subr.mxu0 0.0
        %857 = vmatpush1.msra.mxu0 0.0
        %858 = vmatprep.subr.mxu0 0.0
        %859 = vmatpush1.msra.mxu0 0.0
        %860 = vmatprep.subr.mxu0 0.0
        %861 = vmatpush1.msra.mxu0 0.0
        %862 = vmatprep.subr.mxu0 0.0
        %863 = vmatpush1.msra.mxu0 0.0
        %864 = vmatprep.subr.mxu0 0.0
        %865 = vmatpush1.msra.mxu0 0.0
        %866 = vmatprep.subr.mxu0 0.0
        %867 = vmatpush1.msra.mxu0 0.0
        %868 = vmatprep.subr.mxu0 0.0
        %869 = vmatpush1.msra.mxu0 0.0
        %870 = vmatprep.subr.mxu0 0.0
        %871 = vmatpush1.msra.mxu0 0.0
        %872 = vmatprep.subr.mxu0 0.0
        %873 = vmatpush1.msra.mxu0 0.0
        %874 = vmatprep.subr.mxu0 0.0
        %875 = vmatpush1.msra.mxu0 0.0
        %876 = vmatprep.subr.mxu0 0.0
        %877 = vmatpush1.msra.mxu0 0.0
        %878 = vmatprep.subr.mxu0 0.0
        %879 = vmatpush1.msra.mxu0 0.0
        %880 = vmatprep.subr.mxu0 0.0
        %881 = vmatpush1.msra.mxu0 0.0
        %882 = vmatprep.subr.mxu0 0.0
        %883 = vmatpush1.msra.mxu0 0.0
        %884 = vmatprep.subr.mxu0 0.0
        %885 = vmatpush1.msra.mxu0 0.0
        %886 = vmatprep.subr.mxu0 0.0
        %887 = vmatpush1.msra.mxu0 0.0
        %888 = vmatprep.subr.mxu0 0.0
        %889 = vmatpush1.msra.mxu0 0.0
        %890 = vmatprep.subr.mxu0 0.0
        %891 = vmatpush1.msra.mxu0 0.0
        %892 = vmatprep.subr.mxu0 0.0
        %893 = vmatpush1.msra.mxu0 0.0
        %894 = vmatprep.subr.mxu0 0.0
        %895 = vmatpush1.msra.mxu0 0.0
        %896 = vmatprep.subr.mxu0 0.0
        %897 = vmatpush1.msra.mxu0 0.0
        %898 = vmatprep.mubr.f32.mxu0 0.0
        %v899 = vand.u32 %v309, 4294901760
        %900 = vmatmul.mubr.f32.gmra.mrb[0].mxu0 %v899
        %v901 = vpop.f32.mrb[0].mxu0
        %v902 = vadd.f32 %v815, %v901
        %v903 = vpop.f32.mrb[0].mxu0
        %v904 = vadd.f32 %v817, %v903
        %905 = vmatprep.mubr.f32.mxu0 0.0
        %v906 = vand.u32 %v312, 4294901760
        %907 = vmatmul.mubr.f32.gmra.mrb[0].mxu0 %v906
        %v908 = vpop.f32.mrb[0].mxu0
        %v909 = vadd.f32 %v822, %v908
        %v910 = vpop.f32.mrb[0].mxu0
        %v911 = vadd.f32 %v824, %v910
        %912 = vdwg.mxu0
        %v913 = vmul.f32 %v293, %v902
        %v914 = vmul.f32 %v294, %v904
        %v915 = vmul.f32 %v295, %v909
        %v916 = vmul.f32 %v296, %v911
        %917 = vst [vmem:[%s286] sm:$0xff] %v913
        %918 = vst [vmem:[%s286 + $0x8] sm:$0xff] %v914
        %919 = vst [vmem:[%s286 + $0x10] sm:$0xff] %v915
        %920 = vst [vmem:[%s286 + $0x18] sm:$0xff] %v916
        %s921 = sand.u32 %s138, 1
        %s922 = scalar_lea.sflag [#allocation4], %s921
        %s923 = sand.u32 %s138, 1
        %s924 = smul.addr %s923, 32
        %s925 = scalar_lea.vmem [#allocation8], %s924
        // Predicated region
        $region45: #{mlca_forward.7} parent=31 // pred_check
          %p926 = pneg %p148
        $region46: #{mlca_forward.7} parent=31 // pred_check_branch
          %928 = sbr.rel (%p926) target = $region48
        $region47: #{mlca_forward.7} parent=31 // pred_region
          %s929 = smul.u32 2, %s29
          %s930 = smul.u32 2, %s30
          %s932 = ssub.s32 512, 512
          %933 = vsyncadd %s922, %s932
          %s934 = smul.addr %s929, 2
          %s935 = sadd.s32 %s930, %s934
          %s936 = smul.addr %s28, 4
          %s937 = sadd.s32 %s935, %s936
          %s938 = smul.addr %s937, 128
          %s939 = scalar_lea.hbm %s3, %s938
          %s940 = sshll.u32 %s925, 4
          %s941 = int_to_ptr.vmem [resolvable:$true] %s940
          %946 = dma.vmem_to_hbm [thread:$0]  %s941, 512, %s939, %s922, 256, 256, 16
        $region48: #{mlca_forward.7} parent=31 // pred_fallthru
          _
      $region32: #{mlca_forward.7} parent=5 // pred_fallthru
        _
      %p947 = scmp.le.s32.totalorder 2, %s18
      // Predicated region
      $region49: #{mlca_forward.7} parent=5 // pred_check
        %p948 = pneg %p947
      $region50: #{mlca_forward.7} parent=5 // pred_check_branch
        %950 = sbr.rel (%p948) target = $region52
      $region51: #{mlca_forward.7} parent=5 // pred_region
        %s951 = ssub.s32 %s18, 2
        // Predicated region
        $region53: #{mlca_forward.7} parent=51 // pred_check
          %p952 = pneg %p154
        $region54: #{mlca_forward.7} parent=51 // pred_check_branch
          %954 = sbr.rel (%p952) target = $region56
        $region55: #{mlca_forward.7} parent=51 // pred_region
          %s955 = sand.u32 %s139, 1
          %s956 = scalar_lea.sflag [#allocation4], %s955
          %s957 = sand.u32 %s139, 1
          %s958 = smul.addr %s957, 32
          %s959 = scalar_lea.vmem [#allocation8], %s958
          %960 = dma.done %s956, 512
        $region56: #{mlca_forward.7} parent=51 // pred_fallthru
          _
      $region52: #{mlca_forward.7} parent=5 // pred_fallthru
        _
    $region6: #{mlca_forward.7} parent=1 // loop_footer
      %s22 = sadd.s32 1, %s18
    $region7: #{mlca_forward.7} parent=1 // loop_footer_branch
      %17 = sbr.rel target = $region3
    $region8: #{mlca_forward.7} parent=1 // loop_exit
      _
    %961 = vsyncpa [#allocation3], 1
    %s962 = scalar_lea.sflag [#allocation3], 1
    %963 = vsyncpa %s962, 1
    %964 = vsyncpa [#allocation6], 1
    %s965 = scalar_lea.sflag [#allocation6], 1
    %966 = vsyncpa %s965, 1
    %967 = vsyncpa [#allocation4], 1
    %s968 = scalar_lea.sflag [#allocation4], 1
    %969 = vsyncpa %s968, 1

</llo_original>
